<compile_context>
chip_gen: v6e
topology: v6e:2x2x1
jax: 0.10.0
libtpu: 0.0.40
codegen_flags: <defaults>
</compile_context>

<pallas_src>
import numpy as np
import jax
import jax.numpy as jnp
from jax.experimental import pallas as pl
from jax.experimental.pallas import tpu as pltpu

VMEM_SPEC = pl.BlockSpec(memory_space=pltpu.MemorySpace.VMEM)


def _round_up(x, m):
    return ((x + m - 1) // m) * m


# ----------------------------------------------------------------------------
# Kernels
# ----------------------------------------------------------------------------
def r_projection_kernel(hse_ref, wd_ref, bd_ref, w0r_ref, b0_ref, o_ref):
    # hse: (B, 5d)  wd: (5d, d)  bd: (1, d)
    # w0r: (d, 2*pool*dp)  b0: (1, 2*pool*dp)
    # o  : (B, 2*pool*dp)  ==  tanh(hse @ wd + bd) @ w0r + b0
    r = jnp.tanh(
        jnp.dot(hse_ref[...], wd_ref[...], preferred_element_type=jnp.float32)
        + bd_ref[...])
    o_ref[...] = (jnp.dot(r, w0r_ref[...], preferred_element_type=jnp.float32)
                  + b0_ref[...])


def hmn_fused_kernel(ut_ref, rw0_ref, w0_ref,
                     w1s_ref, b1s_ref, w1e_ref, b1e_ref,
                     w2s_ref, b2s_ref, w2e_ref, b2e_ref,
                     alpha_ref, beta_ref):
    # ut : (1, TL, 2d)        bf16   (one batch, TL context positions)
    # rw0: (1, 1, 2*pool*dp)  f32    (per-batch  r @ W0_r + b0, start||end)
    # w0 : (2d, 2*pool*dp)    bf16
    # w1*: (dp, pool*dp) bf16    b1*: (1, pool*dp) f32
    # w2*: (2*dp, pool)  bf16    b2*: (1, pool)    f32
    # alpha/beta: (1, TL, 1) f32
    dp = w1s_ref.shape[0]
    pool = w2s_ref.shape[1]

    ut = ut_ref[0]                                              # (TL, 2d) bf16
    z0 = (jnp.dot(ut, w0_ref[...], preferred_element_type=jnp.float32)
          + rw0_ref[0])                                         # (TL, 2*pool*dp)

    def pool_max(z, first_block):
        m = z[:, first_block * dp:(first_block + 1) * dp]
        for p in range(1, pool):
            blk = first_block + p
            m = jnp.maximum(m, z[:, blk * dp:(blk + 1) * dp])
        return m

    def head(m1, w1_ref, b1_ref, w2_ref, b2_ref):
        m1_b = m1.astype(jnp.bfloat16)
        z1 = (jnp.dot(m1_b, w1_ref[...], preferred_element_type=jnp.float32)
              + b1_ref[...])                                    # (TL, pool*dp)
        m2 = pool_max(z1, 0)
        m2_b = m2.astype(jnp.bfloat16)
        w2 = w2_ref[...]
        # [m1, m2] @ w2 == m1 @ w2[:dp] + m2 @ w2[dp:]   (no in-kernel concat)
        z2 = (jnp.dot(m1_b, w2[0:dp, :], preferred_element_type=jnp.float32)
              + jnp.dot(m2_b, w2[dp:2 * dp, :], preferred_element_type=jnp.float32)
              + b2_ref[...])                                    # (TL, pool)
        return jnp.max(z2, axis=-1, keepdims=True)              # (TL, 1)

    m1_start = pool_max(z0, 0)          # columns [0, pool*dp)       -> start head
    m1_end = pool_max(z0, pool)         # columns [pool*dp, 2pool*dp)-> end head
    alpha_ref[0] = head(m1_start, w1s_ref, b1s_ref, w2s_ref, b2s_ref)
    beta_ref[0] = head(m1_end, w1e_ref, b1e_ref, w2e_ref, b2e_ref)


def lstm_mlp_kernel(xh_ref, c_ref, w_ref, b_ref, wm_ref, bm_ref,
                    h_out_ref, c_out_ref):
    # xh: (B, 5d) = [start_state, end_state, hidden]
    # w : (5d, 4d) = [Wih.T ; Whh.T]   b: (1, 4d) = bih + bhh
    # wm: (d, d)   bm: (1, d)
    H = c_ref.shape[-1]
    gates = (jnp.dot(xh_ref[...], w_ref[...], preferred_element_type=jnp.float32)
             + b_ref[...])
    i = jax.nn.sigmoid(gates[:, 0:H])
    f = jax.nn.sigmoid(gates[:, H:2 * H])
    g = jnp.tanh(gates[:, 2 * H:3 * H])
    o = jax.nn.sigmoid(gates[:, 3 * H:4 * H])
    c_new = f * c_ref[...] + i * g
    h_new = o * jnp.tanh(c_new)
    c_out_ref[...] = c_new
    h_out_ref[...] = (jnp.dot(h_new, wm_ref[...], preferred_element_type=jnp.float32)
                      + bm_ref[...])


# ----------------------------------------------------------------------------
# Pallas wrappers
# ----------------------------------------------------------------------------
def r_projection(hse, wd, bd, w0r, b0):
    B = hse.shape[0]
    Wc = w0r.shape[1]
    return pl.pallas_call(
        r_projection_kernel,
        out_shape=jax.ShapeDtypeStruct((B, Wc), jnp.float32),
        in_specs=[VMEM_SPEC] * 5,
        out_specs=VMEM_SPEC,
    )(hse, wd, bd, w0r, b0)


def hmn_scores_fused(ut_bf, rw0, w0, w1s, b1s, w1e, b1e, w2s, b2s, w2e, b2e,
                     *, l_tile=None):
    """Fused start/end Highway-Maxout scoring, gridded over (batch, L-tiles)."""
    B, L, D2 = ut_bf.shape
    Wc = w0.shape[1]

    if l_tile is None:
        # Biggest tile that divides L (amortize per-grid-step overhead while
        # bounding VMEM).  On real DCN sizes sweep this upward and raise
        # pltpu.CompilerParams(vmem_limit_bytes=...) on v5e/v6e (128 MiB VMEM);
        # keep it modest on v7x (64 MiB / TC).
        l_tile = L
        for cand in (1024, 512, 256, 128):
            if L > cand and L % cand == 0:
                l_tile = cand
                break
    grid = (B, L // l_tile)

    score_spec = pl.BlockSpec((1, l_tile, 1), lambda b, l: (b, l, 0))
    weight_specs = [
        pl.BlockSpec(w0.shape, lambda b, l: (0, 0)),
        pl.BlockSpec(w1s.shape, lambda b, l: (0, 0)),
        pl.BlockSpec(b1s.shape, lambda b, l: (0, 0)),
        pl.BlockSpec(w1e.shape, lambda b, l: (0, 0)),
        pl.BlockSpec(b1e.shape, lambda b, l: (0, 0)),
        pl.BlockSpec(w2s.shape, lambda b, l: (0, 0)),
        pl.BlockSpec(b2s.shape, lambda b, l: (0, 0)),
        pl.BlockSpec(w2e.shape, lambda b, l: (0, 0)),
        pl.BlockSpec(b2e.shape, lambda b, l: (0, 0)),
    ]

    alpha3, beta3 = pl.pallas_call(
        hmn_fused_kernel,
        out_shape=(jax.ShapeDtypeStruct((B, L, 1), jnp.float32),
                   jax.ShapeDtypeStruct((B, L, 1), jnp.float32)),
        grid=grid,
        in_specs=[pl.BlockSpec((1, l_tile, D2), lambda b, l: (b, l, 0)),
                  pl.BlockSpec((1, 1, Wc), lambda b, l: (b, 0, 0))] + weight_specs,
        out_specs=(score_spec, score_spec),
        compiler_params=pltpu.CompilerParams(
            dimension_semantics=("parallel", "parallel")),
    )(ut_bf, rw0, w0, w1s, b1s, w1e, b1e, w2s, b2s, w2e, b2e)
    return alpha3[..., 0], beta3[..., 0]


def lstm_mlp(xh, c, w, b, wm, bm):
    B, d = c.shape
    return pl.pallas_call(
        lstm_mlp_kernel,
        out_shape=(jax.ShapeDtypeStruct((B, d), jnp.float32),
                   jax.ShapeDtypeStruct((B, d), jnp.float32)),
        in_specs=[VMEM_SPEC] * 6,
        out_specs=(VMEM_SPEC, VMEM_SPEC),
    )(xh, c, w, b, wm, bm)


# ----------------------------------------------------------------------------
# Parameter setup (PyTorch conventions -> kernel-friendly, lane-padded layouts)
# ----------------------------------------------------------------------------
def init_linear(key, out_f, in_f):
    k1, k2 = jax.random.split(key)
    bound = 1.0 / np.sqrt(in_f)
    w = jax.random.uniform(k1, (out_f, in_f), jnp.float32, -bound, bound)
    b = jax.random.uniform(k2, (out_f,), jnp.float32, -bound, bound)
    return w, b


def maxout_weights(w_pt, b_pt, d_out, pool, dp_out):
    """PyTorch Maxout.lin (d_out*pool, d_in) -> kernel layout (d_in, pool*dp_out).
    Pool copy q occupies columns [q*dp_out, q*dp_out + d_out); padded cols are 0."""
    w_pt = np.asarray(w_pt)
    b_pt = np.asarray(b_pt)
    d_in = w_pt.shape[1]
    w_k = np.zeros((d_in, pool * dp_out), np.float32)
    b_k = np.zeros((1, pool * dp_out), np.float32)
    for q in range(pool):
        rows = np.arange(d_out) * pool + q       # PyTorch rows for pool-copy q
        w_k[:, q * dp_out:q * dp_out + d_out] = w_pt[rows].T
        b_k[0, q * dp_out:q * dp_out + d_out] = b_pt[rows]
    return w_k, b_k


def mid_maxout_weights(w_pt, b_pt, d, pool, dp):
    """Stage-1 maxout: pad input rows d -> dp (padded m1 entries are exactly 0)."""
    w_k, b_k = maxout_weights(w_pt, b_pt, d, pool, dp)     # (d, pool*dp)
    w_full = np.zeros((dp, pool * dp), np.float32)
    w_full[:d] = w_k
    return w_full, b_k


def final_maxout_weights(w_pt, b_pt, d, pool, dp):
    """Stage-2 maxout (d_out=1): kernel layout (2*dp, pool); max over pool in-kernel."""
    w_pt = np.asarray(w_pt)                                 # (pool, 2d)
    b_pt = np.asarray(b_pt)                                 # (pool,)
    w_k = np.zeros((2 * dp, pool), np.float32)
    w_k[0:d] = w_pt[:, 0:d].T                               # m1 part
    w_k[dp:dp + d] = w_pt[:, d:2 * d].T                     # m2 part
    return w_k, b_pt.reshape(1, pool).astype(np.float32)


def make_params(key, d_model, pool):
    d = d_model
    dp = _round_up(d, 128)                                  # lane-padded maxout width
    names = ['wd_start', 'wd_end', 'ms0', 'ms1', 'ms2', 'me0', 'me1', 'me2',
             'lstm_ih', 'lstm_hh', 'mlp']
    keys = dict(zip(names, jax.random.split(key, len(names))))

    pt = {}
    pt['wd_start_w'], pt['wd_start_b'] = init_linear(keys['wd_start'], d, 5 * d)
    pt['wd_end_w'], pt['wd_end_b'] = init_linear(keys['wd_end'], d, 5 * d)  # unused in fwd (mirrors module)
    pt['ms0_w'], pt['ms0_b'] = init_linear(keys['ms0'], d * pool, 3 * d)
    pt['ms1_w'], pt['ms1_b'] = init_linear(keys['ms1'], d * pool, d)
    pt['ms2_w'], pt['ms2_b'] = init_linear(keys['ms2'], 1 * pool, 2 * d)
    pt['me0_w'], pt['me0_b'] = init_linear(keys['me0'], d * pool, 3 * d)
    pt['me1_w'], pt['me1_b'] = init_linear(keys['me1'], d * pool, d)
    pt['me2_w'], pt['me2_b'] = init_linear(keys['me2'], 1 * pool, 2 * d)
    pt['lstm_wih'], pt['lstm_bih'] = init_linear(keys['lstm_ih'], 4 * d, 4 * d)
    pt['lstm_whh'], pt['lstm_bhh'] = init_linear(keys['lstm_hh'], 4 * d, d)
    pt['mlp_w'], pt['mlp_b'] = init_linear(keys['mlp'], d, d)

    # layer 0: pool-major + lane-padded, split into ut / r parts, start||end fused
    w0s, b0s = maxout_weights(pt['ms0_w'], pt['ms0_b'], d, pool, dp)   # (3d, pool*dp)
    w0e, b0e = maxout_weights(pt['me0_w'], pt['me0_b'], d, pool, dp)
    w0ut = np.concatenate([w0s[:2 * d], w0e[:2 * d]], axis=1)          # (2d, 2*pool*dp)
    w0r = np.concatenate([w0s[2 * d:], w0e[2 * d:]], axis=1)           # (d,  2*pool*dp)
    b0 = np.concatenate([b0s, b0e], axis=1)                            # (1,  2*pool*dp)

    w1s, b1s = mid_maxout_weights(pt['ms1_w'], pt['ms1_b'], d, pool, dp)
    w1e, b1e = mid_maxout_weights(pt['me1_w'], pt['me1_b'], d, pool, dp)
    w2s, b2s = final_maxout_weights(pt['ms2_w'], pt['ms2_b'], d, pool, dp)
    w2e, b2e = final_maxout_weights(pt['me2_w'], pt['me2_b'], d, pool, dp)

    bf16 = jnp.bfloat16
    kp = {
        # r projection (f32, tiny)
        'wd_w': jnp.asarray(np.asarray(pt['wd_start_w']).T),
        'wd_b': jnp.asarray(np.asarray(pt['wd_start_b']).reshape(1, -1)),
        'w0r': jnp.asarray(w0r),
        'b0': jnp.asarray(b0),
        # fused HMN (bf16 MXU operands, f32 biases)
        'w0ut': jnp.asarray(w0ut, dtype=bf16),
        'w1s': jnp.asarray(w1s, dtype=bf16), 'b1s': jnp.asarray(b1s),
        'w1e': jnp.asarray(w1e, dtype=bf16), 'b1e': jnp.asarray(b1e),
        'w2s': jnp.asarray(w2s, dtype=bf16), 'b2s': jnp.asarray(b2s),
        'w2e': jnp.asarray(w2e, dtype=bf16), 'b2e': jnp.asarray(b2e),
        # fused LSTMCell + mlp (f32)
        'lstm_w': jnp.asarray(np.concatenate(
            [np.asarray(pt['lstm_wih']).T, np.asarray(pt['lstm_whh']).T], axis=0)),
        'lstm_b': jnp.asarray((np.asarray(pt['lstm_bih'])
                               + np.asarray(pt['lstm_bhh'])).reshape(1, -1)),
        'mlp_w': jnp.asarray(np.asarray(pt['mlp_w']).T),
        'mlp_b': jnp.asarray(np.asarray(pt['mlp_b']).reshape(1, -1)),
    }
    return pt, kp


# ----------------------------------------------------------------------------
# Full forward (Pallas kernels + tiny JAX glue)
# ----------------------------------------------------------------------------
def highway_maxout_forward(ut, start_state, end_state, hidden, cell, kp):
    B, L, _ = ut.shape

    # r = tanh(Wd_start([hidden; start; end])) folded directly into the layer-0
    # maxout bias: rw0 = r @ W0_r + b0  (per batch, start||end heads fused).
    h_s_e = jnp.concatenate([hidden, start_state, end_state], axis=-1)
    rw0 = r_projection(h_s_e, kp['wd_w'], kp['wd_b'], kp['w0r'], kp['b0'])   # (B, Wc)

    # NOTE: the original torch code recomputes h_s_e after picking `start` but
    # never recomputes r, so the end (beta) head reuses the same r — reproduced
    # faithfully here by fusing both heads on the same rw0.
    alpha, beta = hmn_scores_fused(
        ut.astype(jnp.bfloat16), rw0.reshape(B, 1, -1),
        kp['w0ut'], kp['w1s'], kp['b1s'], kp['w1e'], kp['b1e'],
        kp['w2s'], kp['b2s'], kp['w2e'], kp['b2e'])                           # (B, L) each

    # TODO(synk): fold the argmax + ut-row gather into the fused kernel (scratch
    # accumulator over L) to remove these tiny intermediate HBM round-trips.
    start = jnp.argmax(alpha, axis=-1)
    end = jnp.argmax(beta, axis=-1)
    start_state_new = ut[jnp.arange(B), start, :]                             # (B, 2d)
    end_state_new = ut[jnp.arange(B), end, :]                                 # (B, 2d)

    xh = jnp.concatenate([start_state_new, end_state_new, hidden], axis=-1)   # (B, 5d)
    hidden_new, cell_new = lstm_mlp(xh, cell, kp['lstm_w'], kp['lstm_b'],
                                    kp['mlp_w'], kp['mlp_b'])
    return (alpha, beta, hidden_new, cell_new,
            start_state_new, end_state_new, start, end)


# ----------------------------------------------------------------------------
# Pure-JAX f32 reference (mirrors the PyTorch forward) for validation
# ----------------------------------------------------------------------------
def _maxout_ref(x, W, b, d_out, pool):
    y = x @ W.T + b
    return y.reshape(y.shape[0], d_out, pool).max(axis=-1)


def _reference_scores(ut, r, pt, prefix, d, pool):
    B, L, _ = ut.shape
    cols = []
    for j in range(L):
        e_r = jnp.concatenate([ut[:, j, :], r], -1)
        m1 = _maxout_ref(e_r, pt[prefix + '0_w'], pt[prefix + '0_b'], d, pool)
        m2 = _maxout_ref(m1, pt[prefix + '1_w'], pt[prefix + '1_b'], d, pool)
        s = _maxout_ref(jnp.concatenate([m1, m2], -1),
                        pt[prefix + '2_w'], pt[prefix + '2_b'], 1, pool)
        cols.append(s)
    return jnp.concatenate(cols, -1)


def reference_tail(ut, hidden, cell, pt, start_idx, end_idx):
    B = ut.shape[0]
    d = hidden.shape[-1]
    ss = ut[jnp.arange(B), start_idx, :]
    es = ut[jnp.arange(B), end_idx, :]
    xin = jnp.concatenate([ss, es], -1)
    gates = (xin @ pt['lstm_wih'].T + pt['lstm_bih']
             + hidden @ pt['lstm_whh'].T + pt['lstm_bhh'])
    i = jax.nn.sigmoid(gates[:, :d])
    f = jax.nn.sigmoid(gates[:, d:2 * d])
    g = jnp.tanh(gates[:, 2 * d:3 * d])
    o = jax.nn.sigmoid(gates[:, 3 * d:])
    c_new = f * cell + i * g
    h_new = o * jnp.tanh(c_new)
    h_new = h_new @ pt['mlp_w'].T + pt['mlp_b']
    return ss, es, h_new, c_new


def reference_forward(ut, start_state, end_state, hidden, cell, pt, pool):
    d = hidden.shape[-1]
    h_s_e = jnp.concatenate([hidden, start_state, end_state], -1)
    r = jnp.tanh(h_s_e @ pt['wd_start_w'].T + pt['wd_start_b'])
    alpha = _reference_scores(ut, r, pt, 'ms', d, pool)
    start = jnp.argmax(alpha, -1)
    beta = _reference_scores(ut, r, pt, 'me', d, pool)
    end = jnp.argmax(beta, -1)
    ss, es, h_new, c_new = reference_tail(ut, hidden, cell, pt, start, end)
    return alpha, beta, h_new, c_new, ss, es, start, end


def _check_pick(name, idx_kernel, ref_scores, tol=1e-1):
    idx_kernel = np.asarray(idx_kernel)
    ref_scores = np.asarray(ref_scores)
    picked = ref_scores[np.arange(ref_scores.shape[0]), idx_kernel]
    best = ref_scores.max(axis=-1)
    # bf16 MXU operands can legitimately flip a near-tie argmax; require the
    # kernel's pick to score within `tol` of the true (f32) maximum.
    assert np.all(picked >= best - tol), (
        f"{name}: kernel pick not within {tol} of the reference maximum")


# ----------------------------------------------------------------------------
if __name__ == "__main__":
    d_model, pool = 32, 2
    B, L = 2, 8

    key = jax.random.PRNGKey(0)
    k_ut, k_ss, k_es, k_h, k_c, k_p = jax.random.split(key, 6)
    ut = jax.random.normal(k_ut, (B, L, 2 * d_model), jnp.float32)
    start_state = jax.random.normal(k_ss, (B, 2 * d_model), jnp.float32)
    end_state = jax.random.normal(k_es, (B, 2 * d_model), jnp.float32)
    hidden = jax.random.normal(k_h, (B, d_model), jnp.float32)
    cell = jax.random.normal(k_c, (B, d_model), jnp.float32)

    pt_params, kernel_params = make_params(k_p, d_model, pool)

    fwd = jax.jit(highway_maxout_forward)
    outs = jax.block_until_ready(
        fwd(ut, start_state, end_state, hidden, cell, kernel_params))
    (alpha_k, beta_k, hidden_k, cell_k, ss_k, es_k, start_k, end_k) = outs

    (alpha_r, beta_r, hidden_r, cell_r, ss_r, es_r, start_r, end_r) = \
        reference_forward(ut, start_state, end_state, hidden, cell, pt_params, pool)

    # Scores (bf16 MXU path) vs the f32 reference.
    np.testing.assert_allclose(np.asarray(alpha_k), np.asarray(alpha_r),
                               rtol=5e-2, atol=5e-2)
    np.testing.assert_allclose(np.asarray(beta_k), np.asarray(beta_r),
                               rtol=5e-2, atol=5e-2)

    # Argmax picks (robust to near-ties under bf16 rounding).
    _check_pick("alpha/start", start_k, alpha_r)
    _check_pick("beta/end", end_k, beta_r)

    # Gather + LSTMCell + final Linear (f32 path) validated tightly for the
    # kernel's chosen indices.
    ss_t, es_t, hidden_t, cell_t = reference_tail(
        ut, hidden, cell, pt_params, jnp.asarray(start_k), jnp.asarray(end_k))
    np.testing.assert_allclose(np.asarray(ss_k), np.asarray(ss_t), rtol=1e-5, atol=1e-5)
    np.testing.assert_allclose(np.asarray(es_k), np.asarray(es_t), rtol=1e-5, atol=1e-5)
    np.testing.assert_allclose(np.asarray(hidden_k), np.asarray(hidden_t),
                               rtol=1e-4, atol=1e-4)
    np.testing.assert_allclose(np.asarray(cell_k), np.asarray(cell_t),
                               rtol=1e-4, atol=1e-4)

    print("KERNEL_OK")
</pallas_src>

<mosaic_0001>
module attributes {stable_mosaic.version = 11 : i64} {
  func.func @r_projection_kernel(%arg0: memref<2x160xf32, #tpu.memory_space<vmem>>, %arg1: memref<160x32xf32, #tpu.memory_space<vmem>>, %arg2: memref<1x32xf32, #tpu.memory_space<vmem>>, %arg3: memref<32x512xf32, #tpu.memory_space<vmem>>, %arg4: memref<1x512xf32, #tpu.memory_space<vmem>>, %arg5: memref<2x512xf32, #tpu.memory_space<vmem>>) attributes {dimension_semantics = [], scalar_prefetch = 0 : i64, scratch_operands = 0 : i64, tpu.core_type = #tpu.core_type<tc>} {
    %c0 = arith.constant 0 : index
    %c0_0 = arith.constant 0 : index
    %0 = vector.load %arg0[%c0, %c0_0] : memref<2x160xf32, #tpu.memory_space<vmem>>, vector<2x160xf32>
    %c0_1 = arith.constant 0 : index
    %c0_2 = arith.constant 0 : index
    %1 = vector.load %arg1[%c0_1, %c0_2] : memref<160x32xf32, #tpu.memory_space<vmem>>, vector<160x32xf32>
    %cst = arith.constant dense<0.000000e+00> : vector<2x32xf32>
    %2 = tpu.matmul %0, %1, %cst {dimension_numbers = #tpu.dot_dimension_numbers<[1], [0], [0], [1], [0, 0, 1, 1], [], []>} : vector<2x160xf32>, vector<160x32xf32>, vector<2x32xf32> -> vector<2x32xf32>
    %c0_3 = arith.constant 0 : index
    %c0_4 = arith.constant 0 : index
    %3 = vector.load %arg2[%c0_3, %c0_4] : memref<1x32xf32, #tpu.memory_space<vmem>>, vector<1x32xf32>
    %4 = vector.broadcast %3 : vector<1x32xf32> to vector<2x32xf32>
    %5 = arith.addf %2, %4 : vector<2x32xf32>
    %6 = math.tanh %5 : vector<2x32xf32>
    %c0_5 = arith.constant 0 : index
    %c0_6 = arith.constant 0 : index
    %7 = vector.load %arg3[%c0_5, %c0_6] : memref<32x512xf32, #tpu.memory_space<vmem>>, vector<32x512xf32>
    %cst_7 = arith.constant dense<0.000000e+00> : vector<2x512xf32>
    %8 = tpu.matmul %6, %7, %cst_7 {dimension_numbers = #tpu.dot_dimension_numbers<[1], [0], [0], [1], [0, 0, 1, 1], [], []>} : vector<2x32xf32>, vector<32x512xf32>, vector<2x512xf32> -> vector<2x512xf32>
    %c0_8 = arith.constant 0 : index
    %c0_9 = arith.constant 0 : index
    %9 = vector.load %arg4[%c0_8, %c0_9] : memref<1x512xf32, #tpu.memory_space<vmem>>, vector<1x512xf32>
    %10 = vector.broadcast %9 : vector<1x512xf32> to vector<2x512xf32>
    %11 = arith.addf %8, %10 : vector<2x512xf32>
    %c0_10 = arith.constant 0 : index
    %c0_11 = arith.constant 0 : index
    %12 = vector.load %arg5[%c0_10, %c0_11] : memref<2x512xf32, #tpu.memory_space<vmem>>, vector<2x512xf32>
    tpu.vector_store %arg5[%c0_10, %c0_11], %11 {strides = array<i32>} : memref<2x512xf32, #tpu.memory_space<vmem>>, vector<2x512xf32>,
    return
  }
}

module attributes {stable_mosaic.version = 11 : i64} {
  func.func @lstm_mlp_kernel(%arg0: memref<2x160xf32, #tpu.memory_space<vmem>>, %arg1: memref<2x32xf32, #tpu.memory_space<vmem>>, %arg2: memref<160x128xf32, #tpu.memory_space<vmem>>, %arg3: memref<1x128xf32, #tpu.memory_space<vmem>>, %arg4: memref<32x32xf32, #tpu.memory_space<vmem>>, %arg5: memref<1x32xf32, #tpu.memory_space<vmem>>, %arg6: memref<2x32xf32, #tpu.memory_space<vmem>>, %arg7: memref<2x32xf32, #tpu.memory_space<vmem>>) attributes {dimension_semantics = [], scalar_prefetch = 0 : i64, scratch_operands = 0 : i64, tpu.core_type = #tpu.core_type<tc>} {
    %c0 = arith.constant 0 : index
    %c0_0 = arith.constant 0 : index
    %0 = vector.load %arg0[%c0, %c0_0] : memref<2x160xf32, #tpu.memory_space<vmem>>, vector<2x160xf32>
    %c0_1 = arith.constant 0 : index
    %c0_2 = arith.constant 0 : index
    %1 = vector.load %arg2[%c0_1, %c0_2] : memref<160x128xf32, #tpu.memory_space<vmem>>, vector<160x128xf32>
    %cst = arith.constant dense<0.000000e+00> : vector<2x128xf32>
    %2 = tpu.matmul %0, %1, %cst {dimension_numbers = #tpu.dot_dimension_numbers<[1], [0], [0], [1], [0, 0, 1, 1], [], []>} : vector<2x160xf32>, vector<160x128xf32>, vector<2x128xf32> -> vector<2x128xf32>
    %c0_3 = arith.constant 0 : index
    %c0_4 = arith.constant 0 : index
    %3 = vector.load %arg3[%c0_3, %c0_4] : memref<1x128xf32, #tpu.memory_space<vmem>>, vector<1x128xf32>
    %4 = vector.broadcast %3 : vector<1x128xf32> to vector<2x128xf32>
    %5 = arith.addf %2, %4 : vector<2x128xf32>
    %6 = vector.extract_strided_slice %5 {offsets = [0, 0], sizes = [2, 32], strides = [1, 1]} : vector<2x128xf32> to vector<2x32xf32>
    %7 = arith.negf %6 : vector<2x32xf32>
    %8 = math.exp %7 : vector<2x32xf32>
    %cst_5 = arith.constant 1.000000e+00 : f32
    %9 = vector.broadcast %cst_5 : f32 to vector<2x32xf32>
    %10 = arith.addf %9, %8 : vector<2x32xf32>
    %11 = arith.divf %9, %10 : vector<2x32xf32>
    %12 = vector.extract_strided_slice %5 {offsets = [0, 32], sizes = [2, 32], strides = [1, 1]} : vector<2x128xf32> to vector<2x32xf32>
    %13 = arith.negf %12 : vector<2x32xf32>
    %14 = math.exp %13 : vector<2x32xf32>
    %cst_6 = arith.constant 1.000000e+00 : f32
    %15 = vector.broadcast %cst_6 : f32 to vector<2x32xf32>
    %16 = arith.addf %15, %14 : vector<2x32xf32>
    %17 = arith.divf %15, %16 : vector<2x32xf32>
    %18 = vector.extract_strided_slice %5 {offsets = [0, 64], sizes = [2, 32], strides = [1, 1]} : vector<2x128xf32> to vector<2x32xf32>
    %19 = math.tanh %18 : vector<2x32xf32>
    %20 = vector.extract_strided_slice %5 {offsets = [0, 96], sizes = [2, 32], strides = [1, 1]} : vector<2x128xf32> to vector<2x32xf32>
    %21 = arith.negf %20 : vector<2x32xf32>
    %22 = math.exp %21 : vector<2x32xf32>
    %cst_7 = arith.constant 1.000000e+00 : f32
    %23 = vector.broadcast %cst_7 : f32 to vector<2x32xf32>
    %24 = arith.addf %23, %22 : vector<2x32xf32>
    %25 = arith.divf %23, %24 : vector<2x32xf32>
    %c0_8 = arith.constant 0 : index
    %c0_9 = arith.constant 0 : index
    %26 = vector.load %arg1[%c0_8, %c0_9] : memref<2x32xf32, #tpu.memory_space<vmem>>, vector<2x32xf32>
    %27 = arith.mulf %17, %26 : vector<2x32xf32>
    %28 = arith.mulf %11, %19 : vector<2x32xf32>
    %29 = arith.addf %27, %28 : vector<2x32xf32>
    %30 = math.tanh %29 : vector<2x32xf32>
    %31 = arith.mulf %25, %30 : vector<2x32xf32>
    %c0_10 = arith.constant 0 : index
    %c0_11 = arith.constant 0 : index
    %32 = vector.load %arg7[%c0_10, %c0_11] : memref<2x32xf32, #tpu.memory_space<vmem>>, vector<2x32xf32>
    tpu.vector_store %arg7[%c0_10, %c0_11], %29 {strides = array<i32>} : memref<2x32xf32, #tpu.memory_space<vmem>>, vector<2x32xf32>,
    %c0_12 = arith.constant 0 : index
    %c0_13 = arith.constant 0 : index
    %33 = vector.load %arg4[%c0_12, %c0_13] : memref<32x32xf32, #tpu.memory_space<vmem>>, vector<32x32xf32>
    %cst_14 = arith.constant dense<0.000000e+00> : vector<2x32xf32>
    %34 = tpu.matmul %31, %33, %cst_14 {dimension_numbers = #tpu.dot_dimension_numbers<[1], [0], [0], [1], [0, 0, 1, 1], [], []>} : vector<2x32xf32>, vector<32x32xf32>, vector<2x32xf32> -> vector<2x32xf32>
    %c0_15 = arith.constant 0 : index
    %c0_16 = arith.constant 0 : index
    %35 = vector.load %arg5[%c0_15, %c0_16] : memref<1x32xf32, #tpu.memory_space<vmem>>, vector<1x32xf32>
    %36 = vector.broadcast %35 : vector<1x32xf32> to vector<2x32xf32>
    %37 = arith.addf %34, %36 : vector<2x32xf32>
    %c0_17 = arith.constant 0 : index
    %c0_18 = arith.constant 0 : index
    %38 = vector.load %arg6[%c0_17, %c0_18] : memref<2x32xf32, #tpu.memory_space<vmem>>, vector<2x32xf32>
    tpu.vector_store %arg6[%c0_17, %c0_18], %37 {strides = array<i32>} : memref<2x32xf32, #tpu.memory_space<vmem>>, vector<2x32xf32>,
    return
  }
}

module attributes {stable_mosaic.version = 11 : i64} {
  func.func @hmn_fused_kernel(%arg0: i32, %arg1: i32, %arg2: memref<1x8x64xbf16, #tpu.memory_space<vmem>>, %arg3: memref<1x1x512xf32, #tpu.memory_space<vmem>>, %arg4: memref<64x512xbf16, #tpu.memory_space<vmem>>, %arg5: memref<128x256xbf16, #tpu.memory_space<vmem>>, %arg6: memref<1x256xf32, #tpu.memory_space<vmem>>, %arg7: memref<128x256xbf16, #tpu.memory_space<vmem>>, %arg8: memref<1x256xf32, #tpu.memory_space<vmem>>, %arg9: memref<256x2xbf16, #tpu.memory_space<vmem>>, %arg10: memref<1x2xf32, #tpu.memory_space<vmem>>, %arg11: memref<256x2xbf16, #tpu.memory_space<vmem>>, %arg12: memref<1x2xf32, #tpu.memory_space<vmem>>, %arg13: memref<1x8x1xf32, #tpu.memory_space<vmem>>, %arg14: memref<1x8x1xf32, #tpu.memory_space<vmem>>) attributes {dimension_semantics = [#tpu.dimension_semantics<parallel>, #tpu.dimension_semantics<parallel>], iteration_bounds = array<i64: 2, 1>, scalar_prefetch = 0 : i64, scratch_operands = 0 : i64, tpu.core_type = #tpu.core_type<tc>, window_params = [{transform_indices = @transform_0, window_bounds = array<i64: 1, 8, 64>}, {transform_indices = @transform_1, window_bounds = array<i64: 1, 1, 512>}, {pipeline_mode = #tpu.pipeline_mode<synchronous>, transform_indices = @transform_2, window_bounds = array<i64: 64, 512>}, {pipeline_mode = #tpu.pipeline_mode<synchronous>, transform_indices = @transform_3, window_bounds = array<i64: 128, 256>}, {pipeline_mode = #tpu.pipeline_mode<synchronous>, transform_indices = @transform_4, window_bounds = array<i64: 1, 256>}, {pipeline_mode = #tpu.pipeline_mode<synchronous>, transform_indices = @transform_5, window_bounds = array<i64: 128, 256>}, {pipeline_mode = #tpu.pipeline_mode<synchronous>, transform_indices = @transform_6, window_bounds = array<i64: 1, 256>}, {pipeline_mode = #tpu.pipeline_mode<synchronous>, transform_indices = @transform_7, window_bounds = array<i64: 256, 2>}, {pipeline_mode = #tpu.pipeline_mode<synchronous>, transform_indices = @transform_8, window_bounds = array<i64: 1, 2>}, {pipeline_mode = #tpu.pipeline_mode<synchronous>, transform_indices = @transform_9, window_bounds = array<i64: 256, 2>}, {pipeline_mode = #tpu.pipeline_mode<synchronous>, transform_indices = @transform_10, window_bounds = array<i64: 1, 2>}, {transform_indices = @transform_11, window_bounds = array<i64: 1, 8, 1>}, {transform_indices = @transform_12, window_bounds = array<i64: 1, 8, 1>}]} {
    %c0 = arith.constant 0 : index
    %c0_0 = arith.constant 0 : index
    %c0_1 = arith.constant 0 : index
    %0 = vector.load %arg2[%c0, %c0_0, %c0_1] : memref<1x8x64xbf16, #tpu.memory_space<vmem>>, vector<1x8x64xbf16>
    %1 = vector.shape_cast %0 : vector<1x8x64xbf16> to vector<8x64xbf16>
    %c0_2 = arith.constant 0 : index
    %c0_3 = arith.constant 0 : index
    %2 = vector.load %arg4[%c0_2, %c0_3] : memref<64x512xbf16, #tpu.memory_space<vmem>>, vector<64x512xbf16>
    %cst = arith.constant dense<0.000000e+00> : vector<8x512xf32>
    %3 = tpu.matmul %1, %2, %cst {dimension_numbers = #tpu.dot_dimension_numbers<[1], [0], [0], [1], [0, 0, 1, 1], [], []>} : vector<8x64xbf16>, vector<64x512xbf16>, vector<8x512xf32> -> vector<8x512xf32>
    %c0_4 = arith.constant 0 : index
    %c0_5 = arith.constant 0 : index
    %c0_6 = arith.constant 0 : index
    %4 = vector.load %arg3[%c0_4, %c0_5, %c0_6] : memref<1x1x512xf32, #tpu.memory_space<vmem>>, vector<1x1x512xf32>
    %5 = vector.shape_cast %4 : vector<1x1x512xf32> to vector<1x512xf32>
    %6 = vector.broadcast %5 : vector<1x512xf32> to vector<8x512xf32>
    %7 = arith.addf %3, %6 : vector<8x512xf32>
    %8 = vector.extract_strided_slice %7 {offsets = [0, 0], sizes = [8, 128], strides = [1, 1]} : vector<8x512xf32> to vector<8x128xf32>
    %9 = vector.extract_strided_slice %7 {offsets = [0, 128], sizes = [8, 128], strides = [1, 1]} : vector<8x512xf32> to vector<8x128xf32>
    %10 = arith.maximumf %8, %9 : vector<8x128xf32>
    %11 = vector.extract_strided_slice %7 {offsets = [0, 256], sizes = [8, 128], strides = [1, 1]} : vector<8x512xf32> to vector<8x128xf32>
    %12 = vector.extract_strided_slice %7 {offsets = [0, 384], sizes = [8, 128], strides = [1, 1]} : vector<8x512xf32> to vector<8x128xf32>
    %13 = arith.maximumf %11, %12 : vector<8x128xf32>
    %14 = arith.truncf %10 : vector<8x128xf32> to vector<8x128xbf16>
    %c0_7 = arith.constant 0 : index
    %c0_8 = arith.constant 0 : index
    %15 = vector.load %arg5[%c0_7, %c0_8] : memref<128x256xbf16, #tpu.memory_space<vmem>>, vector<128x256xbf16>
    %cst_9 = arith.constant dense<0.000000e+00> : vector<8x256xf32>
    %16 = tpu.matmul %14, %15, %cst_9 {dimension_numbers = #tpu.dot_dimension_numbers<[1], [0], [0], [1], [0, 0, 1, 1], [], []>} : vector<8x128xbf16>, vector<128x256xbf16>, vector<8x256xf32> -> vector<8x256xf32>
    %c0_10 = arith.constant 0 : index
    %c0_11 = arith.constant 0 : index
    %17 = vector.load %arg6[%c0_10, %c0_11] : memref<1x256xf32, #tpu.memory_space<vmem>>, vector<1x256xf32>
    %18 = vector.broadcast %17 : vector<1x256xf32> to vector<8x256xf32>
    %19 = arith.addf %16, %18 : vector<8x256xf32>
    %20 = vector.extract_strided_slice %19 {offsets = [0, 0], sizes = [8, 128], strides = [1, 1]} : vector<8x256xf32> to vector<8x128xf32>
    %21 = vector.extract_strided_slice %19 {offsets = [0, 128], sizes = [8, 128], strides = [1, 1]} : vector<8x256xf32> to vector<8x128xf32>
    %22 = arith.maximumf %20, %21 : vector<8x128xf32>
    %23 = arith.truncf %22 : vector<8x128xf32> to vector<8x128xbf16>
    %c0_12 = arith.constant 0 : index
    %c0_13 = arith.constant 0 : index
    %24 = vector.load %arg9[%c0_12, %c0_13] : memref<256x2xbf16, #tpu.memory_space<vmem>>, vector<256x2xbf16>
    %25 = vector.extract_strided_slice %24 {offsets = [0, 0], sizes = [128, 2], strides = [1, 1]} : vector<256x2xbf16> to vector<128x2xbf16>
    %cst_14 = arith.constant dense<0.000000e+00> : vector<8x2xf32>
    %26 = tpu.matmul %14, %25, %cst_14 {dimension_numbers = #tpu.dot_dimension_numbers<[1], [0], [0], [1], [0, 0, 1, 1], [], []>} : vector<8x128xbf16>, vector<128x2xbf16>, vector<8x2xf32> -> vector<8x2xf32>
    %27 = vector.extract_strided_slice %24 {offsets = [128, 0], sizes = [128, 2], strides = [1, 1]} : vector<256x2xbf16> to vector<128x2xbf16>
    %cst_15 = arith.constant dense<0.000000e+00> : vector<8x2xf32>
    %28 = tpu.matmul %23, %27, %cst_15 {dimension_numbers = #tpu.dot_dimension_numbers<[1], [0], [0], [1], [0, 0, 1, 1], [], []>} : vector<8x128xbf16>, vector<128x2xbf16>, vector<8x2xf32> -> vector<8x2xf32>
    %29 = arith.addf %26, %28 : vector<8x2xf32>
    %c0_16 = arith.constant 0 : index
    %c0_17 = arith.constant 0 : index
    %30 = vector.load %arg10[%c0_16, %c0_17] : memref<1x2xf32, #tpu.memory_space<vmem>>, vector<1x2xf32>
    %31 = vector.broadcast %30 : vector<1x2xf32> to vector<8x2xf32>
    %32 = arith.addf %29, %31 : vector<8x2xf32>
    %cst_18 = arith.constant dense<0xFF800000> : vector<8xf32>
    %33 = vector.multi_reduction <maximumf>, %32, %cst_18 [1] : vector<8x2xf32> to vector<8xf32>
    %34 = vector.shape_cast %33 : vector<8xf32> to vector<8x1xf32>
    %c0_19 = arith.constant 0 : index
    %c0_20 = arith.constant 0 : index
    %c0_21 = arith.constant 0 : index
    %35 = vector.load %arg13[%c0_19, %c0_20, %c0_21] : memref<1x8x1xf32, #tpu.memory_space<vmem>>, vector<1x8x1xf32>
    %36 = vector.shape_cast %35 : vector<1x8x1xf32> to vector<8x1xf32>
    %37 = vector.shape_cast %34 : vector<8x1xf32> to vector<1x8x1xf32>
    tpu.vector_store %arg13[%c0_19, %c0_20, %c0_21], %37 {strides = array<i32>} : memref<1x8x1xf32, #tpu.memory_space<vmem>>, vector<1x8x1xf32>,
    %38 = arith.truncf %13 : vector<8x128xf32> to vector<8x128xbf16>
    %c0_22 = arith.constant 0 : index
    %c0_23 = arith.constant 0 : index
    %39 = vector.load %arg7[%c0_22, %c0_23] : memref<128x256xbf16, #tpu.memory_space<vmem>>, vector<128x256xbf16>
    %cst_24 = arith.constant dense<0.000000e+00> : vector<8x256xf32>
    %40 = tpu.matmul %38, %39, %cst_24 {dimension_numbers = #tpu.dot_dimension_numbers<[1], [0], [0], [1], [0, 0, 1, 1], [], []>} : vector<8x128xbf16>, vector<128x256xbf16>, vector<8x256xf32> -> vector<8x256xf32>
    %c0_25 = arith.constant 0 : index
    %c0_26 = arith.constant 0 : index
    %41 = vector.load %arg8[%c0_25, %c0_26] : memref<1x256xf32, #tpu.memory_space<vmem>>, vector<1x256xf32>
    %42 = vector.broadcast %41 : vector<1x256xf32> to vector<8x256xf32>
    %43 = arith.addf %40, %42 : vector<8x256xf32>
    %44 = vector.extract_strided_slice %43 {offsets = [0, 0], sizes = [8, 128], strides = [1, 1]} : vector<8x256xf32> to vector<8x128xf32>
    %45 = vector.extract_strided_slice %43 {offsets = [0, 128], sizes = [8, 128], strides = [1, 1]} : vector<8x256xf32> to vector<8x128xf32>
    %46 = arith.maximumf %44, %45 : vector<8x128xf32>
    %47 = arith.truncf %46 : vector<8x128xf32> to vector<8x128xbf16>
    %c0_27 = arith.constant 0 : index
    %c0_28 = arith.constant 0 : index
    %48 = vector.load %arg11[%c0_27, %c0_28] : memref<256x2xbf16, #tpu.memory_space<vmem>>, vector<256x2xbf16>
    %49 = vector.extract_strided_slice %48 {offsets = [0, 0], sizes = [128, 2], strides = [1, 1]} : vector<256x2xbf16> to vector<128x2xbf16>
    %cst_29 = arith.constant dense<0.000000e+00> : vector<8x2xf32>
    %50 = tpu.matmul %38, %49, %cst_29 {dimension_numbers = #tpu.dot_dimension_numbers<[1], [0], [0], [1], [0, 0, 1, 1], [], []>} : vector<8x128xbf16>, vector<128x2xbf16>, vector<8x2xf32> -> vector<8x2xf32>
    %51 = vector.extract_strided_slice %48 {offsets = [128, 0], sizes = [128, 2], strides = [1, 1]} : vector<256x2xbf16> to vector<128x2xbf16>
    %cst_30 = arith.constant dense<0.000000e+00> : vector<8x2xf32>
    %52 = tpu.matmul %47, %51, %cst_30 {dimension_numbers = #tpu.dot_dimension_numbers<[1], [0], [0], [1], [0, 0, 1, 1], [], []>} : vector<8x128xbf16>, vector<128x2xbf16>, vector<8x2xf32> -> vector<8x2xf32>
    %53 = arith.addf %50, %52 : vector<8x2xf32>
    %c0_31 = arith.constant 0 : index
    %c0_32 = arith.constant 0 : index
    %54 = vector.load %arg12[%c0_31, %c0_32] : memref<1x2xf32, #tpu.memory_space<vmem>>, vector<1x2xf32>
    %55 = vector.broadcast %54 : vector<1x2xf32> to vector<8x2xf32>
    %56 = arith.addf %53, %55 : vector<8x2xf32>
    %cst_33 = arith.constant dense<0xFF800000> : vector<8xf32>
    %57 = vector.multi_reduction <maximumf>, %56, %cst_33 [1] : vector<8x2xf32> to vector<8xf32>
    %58 = vector.shape_cast %57 : vector<8xf32> to vector<8x1xf32>
    %c0_34 = arith.constant 0 : index
    %c0_35 = arith.constant 0 : index
    %c0_36 = arith.constant 0 : index
    %59 = vector.load %arg14[%c0_34, %c0_35, %c0_36] : memref<1x8x1xf32, #tpu.memory_space<vmem>>, vector<1x8x1xf32>
    %60 = vector.shape_cast %59 : vector<1x8x1xf32> to vector<8x1xf32>
    %61 = vector.shape_cast %58 : vector<8x1xf32> to vector<1x8x1xf32>
    tpu.vector_store %arg14[%c0_34, %c0_35, %c0_36], %61 {strides = array<i32>} : memref<1x8x1xf32, #tpu.memory_space<vmem>>, vector<1x8x1xf32>,
    return
  }
  func.func @transform_0(%arg0: i32, %arg1: i32) -> (i32, i32, i32) {
    %c0_i32 = arith.constant 0 : i32
    %c0_i32_0 = arith.constant 0 : i32
    return %arg0, %arg1, %c0_i32 : i32, i32, i32
  }
  func.func @transform_1(%arg0: i32, %arg1: i32) -> (i32, i32, i32) {
    %c0_i32 = arith.constant 0 : i32
    %c0_i32_0 = arith.constant 0 : i32
    %c0_i32_1 = arith.constant 0 : i32
    return %arg0, %c0_i32, %c0_i32_0 : i32, i32, i32
  }
  func.func @transform_2(%arg0: i32, %arg1: i32) -> (i32, i32) {
    %c0_i32 = arith.constant 0 : i32
    %c0_i32_0 = arith.constant 0 : i32
    %c0_i32_1 = arith.constant 0 : i32
    return %c0_i32, %c0_i32_0 : i32, i32
  }
  func.func @transform_3(%arg0: i32, %arg1: i32) -> (i32, i32) {
    %c0_i32 = arith.constant 0 : i32
    %c0_i32_0 = arith.constant 0 : i32
    %c0_i32_1 = arith.constant 0 : i32
    return %c0_i32, %c0_i32_0 : i32, i32
  }
  func.func @transform_4(%arg0: i32, %arg1: i32) -> (i32, i32) {
    %c0_i32 = arith.constant 0 : i32
    %c0_i32_0 = arith.constant 0 : i32
    %c0_i32_1 = arith.constant 0 : i32
    return %c0_i32, %c0_i32_0 : i32, i32
  }
  func.func @transform_5(%arg0: i32, %arg1: i32) -> (i32, i32) {
    %c0_i32 = arith.constant 0 : i32
    %c0_i32_0 = arith.constant 0 : i32
    %c0_i32_1 = arith.constant 0 : i32
    return %c0_i32, %c0_i32_0 : i32, i32
  }
  func.func @transform_6(%arg0: i32, %arg1: i32) -> (i32, i32) {
    %c0_i32 = arith.constant 0 : i32
    %c0_i32_0 = arith.constant 0 : i32
    %c0_i32_1 = arith.constant 0 : i32
    return %c0_i32, %c0_i32_0 : i32, i32
  }
  func.func @transform_7(%arg0: i32, %arg1: i32) -> (i32, i32) {
    %c0_i32 = arith.constant 0 : i32
    %c0_i32_0 = arith.constant 0 : i32
    %c0_i32_1 = arith.constant 0 : i32
    return %c0_i32, %c0_i32_0 : i32, i32
  }
  func.func @transform_8(%arg0: i32, %arg1: i32) -> (i32, i32) {
    %c0_i32 = arith.constant 0 : i32
    %c0_i32_0 = arith.constant 0 : i32
    %c0_i32_1 = arith.constant 0 : i32
    return %c0_i32, %c0_i32_0 : i32, i32
  }
  func.func @transform_9(%arg0: i32, %arg1: i32) -> (i32, i32) {
    %c0_i32 = arith.constant 0 : i32
    %c0_i32_0 = arith.constant 0 : i32
    %c0_i32_1 = arith.constant 0 : i32
    return %c0_i32, %c0_i32_0 : i32, i32
  }
  func.func @transform_10(%arg0: i32, %arg1: i32) -> (i32, i32) {
    %c0_i32 = arith.constant 0 : i32
    %c0_i32_0 = arith.constant 0 : i32
    %c0_i32_1 = arith.constant 0 : i32
    return %c0_i32, %c0_i32_0 : i32, i32
  }
  func.func @transform_11(%arg0: i32, %arg1: i32) -> (i32, i32, i32) {
    %c0_i32 = arith.constant 0 : i32
    %c0_i32_0 = arith.constant 0 : i32
    return %arg0, %arg1, %c0_i32 : i32, i32, i32
  }
  func.func @transform_12(%arg0: i32, %arg1: i32) -> (i32, i32, i32) {
    %c0_i32 = arith.constant 0 : i32
    %c0_i32_0 = arith.constant 0 : i32
    return %arg0, %arg1, %c0_i32 : i32, i32, i32
  }
}

</mosaic_0001>

<llo_original>
// kernel: highway_maxout_forward.3
$region0: #{highway_maxout_forward.3}
  #allocation0 [shape = 'u32[]', space=smem, size = 0x4, offset = 0x4, fixed_abs, tag = 'smem constant byte address 0x4 - core index']
  #allocation1 [shape = 'u32[144,128]{1,0:T(1,128)}', space=vmem, size = 0x12000, scoped, tag = 'internal scratch']
  %s0 = inlined_call_operand.vmem [shape: f32[2,160], index: 0, kind: input, shape index: {}]
  %s1 = inlined_call_operand.vmem [shape: f32[160,32], index: 1, kind: input, shape index: {}]
  %s2 = inlined_call_operand.vmem [shape: f32[1,32], index: 2, kind: input, shape index: {}]
  %s3 = inlined_call_operand.vmem [shape: f32[32,512], index: 3, kind: input, shape index: {}]
  %s4 = inlined_call_operand.vmem [shape: f32[1,512], index: 4, kind: input, shape index: {}]
  %s5 = inlined_call_operand.vmem [shape: f32[2,512], index: 5, kind: output, shape index: {}]
  %s6 = sld [smem:[#allocation0]]
  $region30: #{highway_maxout_forward.3} parent=0
    _
  %s8 = ssub.s32 1, %s6
  %s9 = scalar_select 0, %s8, %s6
  // Predicated region
  $region2: #{highway_maxout_forward.3} parent=0 // pred_check
    _
  $region3: #{highway_maxout_forward.3} parent=0 // pred_check_branch
    %11 = sbr.rel (0) target = $region5
  $region4: #{highway_maxout_forward.3} parent=0 // pred_region
    _
  $region5: #{highway_maxout_forward.3} parent=0 // pred_fallthru
    _
  // Predicated region
  $region6: #{highway_maxout_forward.3} parent=0 // pred_check
    _
  $region7: #{highway_maxout_forward.3} parent=0 // pred_check_branch
    %13 = sbr.rel (0) target = $region9
  $region8: #{highway_maxout_forward.3} parent=0 // pred_region
    _
  $region9: #{highway_maxout_forward.3} parent=0 // pred_fallthru
    _
  // Predicated region
  $region10: #{highway_maxout_forward.3} parent=0 // pred_check
    _
  $region11: #{highway_maxout_forward.3} parent=0 // pred_check_branch
    %15 = sbr.rel (0) target = $region13
  $region12: #{highway_maxout_forward.3} parent=0 // pred_region
    _
  $region13: #{highway_maxout_forward.3} parent=0 // pred_fallthru
    _
  // Predicated region
  $region14: #{highway_maxout_forward.3} parent=0 // pred_check
    _
  $region15: #{highway_maxout_forward.3} parent=0 // pred_check_branch
    %17 = sbr.rel (0) target = $region17
  $region16: #{highway_maxout_forward.3} parent=0 // pred_region
    _
  $region17: #{highway_maxout_forward.3} parent=0 // pred_fallthru
    _
  // Predicated region
  $region18: #{highway_maxout_forward.3} parent=0 // pred_check
    _
  $region19: #{highway_maxout_forward.3} parent=0 // pred_check_branch
    %19 = sbr.rel (0) target = $region21
  $region20: #{highway_maxout_forward.3} parent=0 // pred_region
    _
  $region21: #{highway_maxout_forward.3} parent=0 // pred_fallthru
    _
  %v20 = vld [vmem:[%s0] sm:$0xf]
  %v21 = vld [vmem:[%s1] sm:$0xff]
  %v22 = vld [vmem:[%s1 + $0x8] sm:$0xff]
  %v23 = vld [vmem:[%s1 + $0x10] sm:$0xff]
  %v24 = vld [vmem:[%s1 + $0x18] sm:$0xff]
  %v25 = vld [vmem:[%s1 + $0x20] sm:$0xff]
  %v26 = vld [vmem:[%s1 + $0x28] sm:$0xff]
  %v27 = vld [vmem:[%s1 + $0x30] sm:$0xff]
  %v28 = vld [vmem:[%s1 + $0x38] sm:$0xff]
  %v29 = vld [vmem:[%s1 + $0x40] sm:$0xff]
  %v30 = vld [vmem:[%s1 + $0x48] sm:$0xff]
  %v31 = vld [vmem:[%s1 + $0x50] sm:$0xff]
  %v32 = vld [vmem:[%s1 + $0x58] sm:$0xff]
  %v33 = vld [vmem:[%s1 + $0x60] sm:$0xff]
  %v34 = vld [vmem:[%s1 + $0x68] sm:$0xff]
  %v35 = vld [vmem:[%s1 + $0x70] sm:$0xff]
  %v36 = vld [vmem:[%s1 + $0x78] sm:$0xff]
  %v37 = vld [vmem:[%s1 + $0x80] sm:$0xff]
  %v38 = vld [vmem:[%s1 + $0x88] sm:$0xff]
  %v39 = vld [vmem:[%s1 + $0x90] sm:$0xff]
  %v40 = vld [vmem:[%s1 + $0x98] sm:$0xff]
  %v41 = vld [vmem:[%s2] sm:$0x1]
  %v43 = vlaneseq
  %v44 = vshrl.u32 %v43, 7
  %v45 = vsub.s32 0, %v44
  %v46 = vrot.slane %v41, %v45
  %v50 = vunpack.c.l.s4 1983009808
  %v51 = vunpack.c.0.s8 %v50
  %v52 = vlaneseq
  %v53 = vshrl.u32 %v52, 7
  %v54 = vsub.s32 %v51, %v53
  %v55 = vrot.slane %v20, %v54
  %v56 = vcombine.high %v55, %v55
  %vm58 = vcmask 261120
  %v59 = vsel %vm58, %v56, 0
  %61 = vmatprep.subr.mxu0 0.0
  %62 = vmatpush1.msra.mxu0 %v36
  %63 = vmatprep.subr.mxu0 0.0
  %64 = vmatpush1.msra.mxu0 %v35
  %65 = vmatprep.subr.mxu0 0.0
  %66 = vmatpush1.msra.mxu0 %v34
  %67 = vmatprep.subr.mxu0 0.0
  %68 = vmatpush1.msra.mxu0 %v33
  %69 = vmatprep.subr.mxu0 0.0
  %70 = vmatpush1.msra.mxu0 %v32
  %71 = vmatprep.subr.mxu0 0.0
  %72 = vmatpush1.msra.mxu0 %v31
  %73 = vmatprep.subr.mxu0 0.0
  %74 = vmatpush1.msra.mxu0 %v30
  %75 = vmatprep.subr.mxu0 0.0
  %76 = vmatpush1.msra.mxu0 %v29
  %77 = vmatprep.subr.mxu0 0.0
  %78 = vmatpush1.msra.mxu0 %v28
  %79 = vmatprep.subr.mxu0 0.0
  %80 = vmatpush1.msra.mxu0 %v27
  %81 = vmatprep.subr.mxu0 0.0
  %82 = vmatpush1.msra.mxu0 %v26
  %83 = vmatprep.subr.mxu0 0.0
  %84 = vmatpush1.msra.mxu0 %v25
  %85 = vmatprep.subr.mxu0 0.0
  %86 = vmatpush1.msra.mxu0 %v24
  %87 = vmatprep.subr.mxu0 0.0
  %88 = vmatpush1.msra.mxu0 %v23
  %89 = vmatprep.subr.mxu0 0.0
  %90 = vmatpush1.msra.mxu0 %v22
  %91 = vmatprep.subr.mxu0 0.0
  %92 = vmatpush1.msra.mxu0 %v21
  %93 = vmatprep.subr.mxu0 0.0
  %94 = vmatpush2.msra.mxu0 0.0
  %95 = vmatprep.subr.mxu0 0.0
  %96 = vmatpush2.msra.mxu0 0.0
  %97 = vmatprep.subr.mxu0 0.0
  %98 = vmatpush2.msra.mxu0 0.0
  %99 = vmatprep.subr.mxu0 0.0
  %100 = vmatpush2.msra.mxu0 0.0
  %101 = vmatprep.subr.mxu0 0.0
  %102 = vmatpush2.msra.mxu0 0.0
  %103 = vmatprep.subr.mxu0 0.0
  %104 = vmatpush2.msra.mxu0 0.0
  %105 = vmatprep.subr.mxu0 0.0
  %106 = vmatpush2.msra.mxu0 0.0
  %107 = vmatprep.subr.mxu0 0.0
  %108 = vmatpush2.msra.mxu0 0.0
  %109 = vmatprep.subr.mxu0 0.0
  %110 = vmatpush2.msra.mxu0 0.0
  %111 = vmatprep.subr.mxu0 0.0
  %112 = vmatpush2.msra.mxu0 0.0
  %113 = vmatprep.subr.mxu0 0.0
  %114 = vmatpush2.msra.mxu0 0.0
  %115 = vmatprep.subr.mxu0 0.0
  %116 = vmatpush2.msra.mxu0 0.0
  %117 = vmatprep.subr.mxu0 0.0
  %118 = vmatpush2.msra.mxu0 %v40
  %119 = vmatprep.subr.mxu0 0.0
  %120 = vmatpush2.msra.mxu0 %v39
  %121 = vmatprep.subr.mxu0 0.0
  %122 = vmatpush2.msra.mxu0 %v38
  %123 = vmatprep.subr.mxu0 0.0
  %124 = vmatpush2.msra.mxu0 %v37
  %125 = vmatprep.mubr.f32.mxu0 %v59
  %126 = vmatmul.mubr.f32.gmra.mxu0 %v55
  %v127 = vpop.f32.mrf.mxu0
  %v128 = vadd.f32 %v46, %v127
  %v129 = vpop.f32.mrf.mxu0
  %130 = vdwg.mxu0
  %v131 = vtanh.pop %v128
  %v132 = vld [vmem:[%s3] sm:$0xff]
  %v133 = vld [vmem:[%s3 + $0x8] sm:$0xff]
  %v134 = vld [vmem:[%s3 + $0x10] sm:$0xff]
  %v135 = vld [vmem:[%s3 + $0x18] sm:$0xff]
  %v136 = vld [vmem:[%s3 + $0x20] sm:$0xff]
  %v137 = vld [vmem:[%s3 + $0x28] sm:$0xff]
  %v138 = vld [vmem:[%s3 + $0x30] sm:$0xff]
  %v139 = vld [vmem:[%s3 + $0x38] sm:$0xff]
  %v140 = vld [vmem:[%s3 + $0x40] sm:$0xff]
  %v141 = vld [vmem:[%s3 + $0x48] sm:$0xff]
  %v142 = vld [vmem:[%s3 + $0x50] sm:$0xff]
  %v143 = vld [vmem:[%s3 + $0x58] sm:$0xff]
  %v144 = vld [vmem:[%s3 + $0x60] sm:$0xff]
  %v145 = vld [vmem:[%s3 + $0x68] sm:$0xff]
  %v146 = vld [vmem:[%s3 + $0x70] sm:$0xff]
  %v147 = vld [vmem:[%s3 + $0x78] sm:$0xff]
  %v148 = vld [vmem:[%s4] sm:$0xf]
  %v150 = vlaneseq
  %v151 = vshrl.u32 %v150, 7
  %v152 = vsub.s32 0, %v151
  %v153 = vrot.slane %v148, %v152
  %v154 = vlaneseq
  %v155 = vshrl.u32 %v154, 7
  %v156 = vsub.s32 1, %v155
  %v157 = vrot.slane %v148, %v156
  %v158 = vlaneseq
  %v159 = vshrl.u32 %v158, 7
  %v160 = vsub.s32 2, %v159
  %v161 = vrot.slane %v148, %v160
  %v162 = vlaneseq
  %v163 = vshrl.u32 %v162, 7
  %v164 = vsub.s32 3, %v163
  %v165 = vrot.slane %v148, %v164
  %v171 = vsel %vm58, %v131, 0
  %173 = vmatprep.subr.mxu0 0.0
  %174 = vmatpush1.msra.mxu0 0.0
  %175 = vmatprep.subr.mxu0 0.0
  %176 = vmatpush1.msra.mxu0 0.0
  %177 = vmatprep.subr.mxu0 0.0
  %178 = vmatpush1.msra.mxu0 0.0
  %179 = vmatprep.subr.mxu0 0.0
  %180 = vmatpush1.msra.mxu0 0.0
  %181 = vmatprep.subr.mxu0 0.0
  %182 = vmatpush1.msra.mxu0 0.0
  %183 = vmatprep.subr.mxu0 0.0
  %184 = vmatpush1.msra.mxu0 0.0
  %185 = vmatprep.subr.mxu0 0.0
  %186 = vmatpush1.msra.mxu0 0.0
  %187 = vmatprep.subr.mxu0 0.0
  %188 = vmatpush1.msra.mxu0 0.0
  %189 = vmatprep.subr.mxu0 0.0
  %190 = vmatpush1.msra.mxu0 0.0
  %191 = vmatprep.subr.mxu0 0.0
  %192 = vmatpush1.msra.mxu0 0.0
  %193 = vmatprep.subr.mxu0 0.0
  %194 = vmatpush1.msra.mxu0 0.0
  %195 = vmatprep.subr.mxu0 0.0
  %196 = vmatpush1.msra.mxu0 0.0
  %197 = vmatprep.subr.mxu0 %v145
  %198 = vmatpush1.msra.mxu0 %v144
  %199 = vmatprep.subr.mxu0 %v141
  %200 = vmatpush1.msra.mxu0 %v140
  %201 = vmatprep.subr.mxu0 %v137
  %202 = vmatpush1.msra.mxu0 %v136
  %203 = vmatprep.subr.mxu0 %v133
  %204 = vmatpush1.msra.mxu0 %v132
  %205 = vmatprep.subr.mxu0 0.0
  %206 = vmatpush2.msra.mxu0 0.0
  %207 = vmatprep.subr.mxu0 0.0
  %208 = vmatpush2.msra.mxu0 0.0
  %209 = vmatprep.subr.mxu0 0.0
  %210 = vmatpush2.msra.mxu0 0.0
  %211 = vmatprep.subr.mxu0 0.0
  %212 = vmatpush2.msra.mxu0 0.0
  %213 = vmatprep.subr.mxu0 0.0
  %214 = vmatpush2.msra.mxu0 0.0
  %215 = vmatprep.subr.mxu0 0.0
  %216 = vmatpush2.msra.mxu0 0.0
  %217 = vmatprep.subr.mxu0 0.0
  %218 = vmatpush2.msra.mxu0 0.0
  %219 = vmatprep.subr.mxu0 0.0
  %220 = vmatpush2.msra.mxu0 0.0
  %221 = vmatprep.subr.mxu0 0.0
  %222 = vmatpush2.msra.mxu0 0.0
  %223 = vmatprep.subr.mxu0 0.0
  %224 = vmatpush2.msra.mxu0 0.0
  %225 = vmatprep.subr.mxu0 0.0
  %226 = vmatpush2.msra.mxu0 0.0
  %227 = vmatprep.subr.mxu0 0.0
  %228 = vmatpush2.msra.mxu0 0.0
  %229 = vmatprep.subr.mxu0 0.0
  %230 = vmatpush2.msra.mxu0 0.0
  %231 = vmatprep.subr.mxu0 0.0
  %232 = vmatpush2.msra.mxu0 0.0
  %233 = vmatprep.subr.mxu0 0.0
  %234 = vmatpush2.msra.mxu0 0.0
  %235 = vmatprep.subr.mxu0 0.0
  %236 = vmatpush2.msra.mxu0 0.0
  %237 = vmatprep.mubr.f32.mxu0 0.0
  %238 = vmatmul.mubr.f32.gmra.mxu0 %v171
  %v239 = vpop.f32.mrf.mxu0
  %v240 = vadd.f32 %v153, %v239
  %v241 = vpop.f32.mrf.mxu0
  %v242 = vadd.f32 %v157, %v241
  %243 = vdwg.mxu0
  %244 = vmatprep.subr.mxu0 0.0
  %245 = vmatpush1.msra.mxu0 0.0
  %246 = vmatprep.subr.mxu0 0.0
  %247 = vmatpush1.msra.mxu0 0.0
  %248 = vmatprep.subr.mxu0 0.0
  %249 = vmatpush1.msra.mxu0 0.0
  %250 = vmatprep.subr.mxu0 0.0
  %251 = vmatpush1.msra.mxu0 0.0
  %252 = vmatprep.subr.mxu0 0.0
  %253 = vmatpush1.msra.mxu0 0.0
  %254 = vmatprep.subr.mxu0 0.0
  %255 = vmatpush1.msra.mxu0 0.0
  %256 = vmatprep.subr.mxu0 0.0
  %257 = vmatpush1.msra.mxu0 0.0
  %258 = vmatprep.subr.mxu0 0.0
  %259 = vmatpush1.msra.mxu0 0.0
  %260 = vmatprep.subr.mxu0 0.0
  %261 = vmatpush1.msra.mxu0 0.0
  %262 = vmatprep.subr.mxu0 0.0
  %263 = vmatpush1.msra.mxu0 0.0
  %264 = vmatprep.subr.mxu0 0.0
  %265 = vmatpush1.msra.mxu0 0.0
  %266 = vmatprep.subr.mxu0 0.0
  %267 = vmatpush1.msra.mxu0 0.0
  %268 = vmatprep.subr.mxu0 %v147
  %269 = vmatpush1.msra.mxu0 %v146
  %270 = vmatprep.subr.mxu0 %v143
  %271 = vmatpush1.msra.mxu0 %v142
  %272 = vmatprep.subr.mxu0 %v139
  %273 = vmatpush1.msra.mxu0 %v138
  %274 = vmatprep.subr.mxu0 %v135
  %275 = vmatpush1.msra.mxu0 %v134
  %276 = vmatprep.subr.mxu0 0.0
  %277 = vmatpush2.msra.mxu0 0.0
  %278 = vmatprep.subr.mxu0 0.0
  %279 = vmatpush2.msra.mxu0 0.0
  %280 = vmatprep.subr.mxu0 0.0
  %281 = vmatpush2.msra.mxu0 0.0
  %282 = vmatprep.subr.mxu0 0.0
  %283 = vmatpush2.msra.mxu0 0.0
  %284 = vmatprep.subr.mxu0 0.0
  %285 = vmatpush2.msra.mxu0 0.0
  %286 = vmatprep.subr.mxu0 0.0
  %287 = vmatpush2.msra.mxu0 0.0
  %288 = vmatprep.subr.mxu0 0.0
  %289 = vmatpush2.msra.mxu0 0.0
  %290 = vmatprep.subr.mxu0 0.0
  %291 = vmatpush2.msra.mxu0 0.0
  %292 = vmatprep.subr.mxu0 0.0
  %293 = vmatpush2.msra.mxu0 0.0
  %294 = vmatprep.subr.mxu0 0.0
  %295 = vmatpush2.msra.mxu0 0.0
  %296 = vmatprep.subr.mxu0 0.0
  %297 = vmatpush2.msra.mxu0 0.0
  %298 = vmatprep.subr.mxu0 0.0
  %299 = vmatpush2.msra.mxu0 0.0
  %300 = vmatprep.subr.mxu0 0.0
  %301 = vmatpush2.msra.mxu0 0.0
  %302 = vmatprep.subr.mxu0 0.0
  %303 = vmatpush2.msra.mxu0 0.0
  %304 = vmatprep.subr.mxu0 0.0
  %305 = vmatpush2.msra.mxu0 0.0
  %306 = vmatprep.subr.mxu0 0.0
  %307 = vmatpush2.msra.mxu0 0.0
  %308 = vmatprep.mubr.f32.mxu0 0.0
  %309 = vmatmul.mubr.f32.gmra.mxu0 %v171
  %v310 = vpop.f32.mrf.mxu0
  %v311 = vadd.f32 %v161, %v310
  %v312 = vpop.f32.mrf.mxu0
  %v313 = vadd.f32 %v165, %v312
  %314 = vdwg.mxu0
  %v319 = vcombine.low %v240, %v242
  %v320 = vcombine.low %v311, %v313
  %v322 = vunpack.c.l.s4 1983009808
  %v323 = vunpack.c.0.s8 %v322
  %v324 = vlaneseq
  %v325 = vshrl.u32 %v324, 7
  %v326 = vsub.s32 %v323, %v325
  %v327 = vrot.slane %v319, %v326
  %v329 = vunpack.c.l.s4 1983009808
  %v330 = vunpack.c.0.s8 %v329
  %v331 = vlaneseq
  %v332 = vshrl.u32 %v331, 7
  %v333 = vsub.s32 %v330, %v332
  %v334 = vrot.slane %v320, %v333
  %v335 = vcombine.low %v327, %v334
  %337 = vst [vmem:[%s5] sm:$0xff] %v335
  // Predicated region
  $region22: #{highway_maxout_forward.3} parent=0 // pred_check
    _
  $region23: #{highway_maxout_forward.3} parent=0 // pred_check_branch
    %339 = sbr.rel (0) target = $region25
  $region24: #{highway_maxout_forward.3} parent=0 // pred_region
    _
  $region25: #{highway_maxout_forward.3} parent=0 // pred_fallthru
    _
  // Predicated region
  $region26: #{highway_maxout_forward.3} parent=0 // pred_check
    _
  $region27: #{highway_maxout_forward.3} parent=0 // pred_check_branch
    %341 = sbr.rel (0) target = $region29
  $region28: #{highway_maxout_forward.3} parent=0 // pred_region
    _
  $region29: #{highway_maxout_forward.3} parent=0 // pred_fallthru
    _

// kernel: highway_maxout_forward.5
$region0: #{highway_maxout_forward.5}
  #allocation0 [shape = 'u32[]', space=smem, size = 0x4, offset = 0x4, fixed_abs, tag = 'smem constant byte address 0x4 - core index']
  #allocation1 [shape = 'u32[144,128]{1,0:T(1,128)}', space=vmem, size = 0x12000, scoped, tag = 'internal scratch']
  %s0 = inlined_call_operand.vmem [shape: f32[2,160], index: 0, kind: input, shape index: {}]
  %s1 = inlined_call_operand.vmem [shape: f32[2,32], index: 1, kind: input, shape index: {}]
  %s2 = inlined_call_operand.vmem [shape: f32[160,128], index: 2, kind: input, shape index: {}]
  %s3 = inlined_call_operand.vmem [shape: f32[1,128], index: 3, kind: input, shape index: {}]
  %s4 = inlined_call_operand.vmem [shape: f32[32,32], index: 4, kind: input, shape index: {}]
  %s5 = inlined_call_operand.vmem [shape: f32[1,32], index: 5, kind: input, shape index: {}]
  %s6 = inlined_call_operand.hbm [shape: f32[2,32], index: 6, kind: output, shape index: {0}]
  %s7 = inlined_call_operand.hbm [shape: f32[2,32], index: 7, kind: output, shape index: {1}]
  %8 = xla_tuple %s6, %s7
  %s9 = sld [smem:[#allocation0]]
  $region42: #{highway_maxout_forward.5} parent=0
    _
  %s11 = ssub.s32 1, %s9
  %s12 = scalar_select 0, %s11, %s9
  $region1: #{highway_maxout_forward.5} parent=0
    #allocation2 [shape = 'u8[1024]{0}', space=vmem, size = 0x400, scoped, tag = 'output window, operand 0, single buffered']
    #allocation3 [shape = 's32[1]{0}', space=sflag, size = 0x4, scoped, tag = 'scoped memory for highway_maxout_forward.5']
    #allocation4 [shape = 'u8[1024]{0}', space=vmem, size = 0x400, scoped, tag = 'output window, operand 1, single buffered']
    #allocation5 [shape = 's32[1]{0}', space=sflag, size = 0x4, scoped, tag = 'scoped memory for highway_maxout_forward.5']
    %13 = vsyncpa [#allocation3], 0
    %14 = vsyncpa [#allocation5], 0
    // Predicated region
    $region2: #{highway_maxout_forward.5} parent=1 // pred_check
      _
    $region3: #{highway_maxout_forward.5} parent=1 // pred_check_branch
      %16 = sbr.rel (0) target = $region5
    $region4: #{highway_maxout_forward.5} parent=1 // pred_region
      _
    $region5: #{highway_maxout_forward.5} parent=1 // pred_fallthru
      _
    // Predicated region
    $region6: #{highway_maxout_forward.5} parent=1 // pred_check
      _
    $region7: #{highway_maxout_forward.5} parent=1 // pred_check_branch
      %18 = sbr.rel (0) target = $region9
    $region8: #{highway_maxout_forward.5} parent=1 // pred_region
      _
    $region9: #{highway_maxout_forward.5} parent=1 // pred_fallthru
      _
    // Predicated region
    $region10: #{highway_maxout_forward.5} parent=1 // pred_check
      _
    $region11: #{highway_maxout_forward.5} parent=1 // pred_check_branch
      %20 = sbr.rel (0) target = $region13
    $region12: #{highway_maxout_forward.5} parent=1 // pred_region
      _
    $region13: #{highway_maxout_forward.5} parent=1 // pred_fallthru
      _
    // Predicated region
    $region14: #{highway_maxout_forward.5} parent=1 // pred_check
      _
    $region15: #{highway_maxout_forward.5} parent=1 // pred_check_branch
      %22 = sbr.rel (0) target = $region17
    $region16: #{highway_maxout_forward.5} parent=1 // pred_region
      _
    $region17: #{highway_maxout_forward.5} parent=1 // pred_fallthru
      _
    // Predicated region
    $region18: #{highway_maxout_forward.5} parent=1 // pred_check
      _
    $region19: #{highway_maxout_forward.5} parent=1 // pred_check_branch
      %24 = sbr.rel (0) target = $region21
    $region20: #{highway_maxout_forward.5} parent=1 // pred_region
      _
    $region21: #{highway_maxout_forward.5} parent=1 // pred_fallthru
      _
    // Predicated region
    $region22: #{highway_maxout_forward.5} parent=1 // pred_check
      _
    $region23: #{highway_maxout_forward.5} parent=1 // pred_check_branch
      %26 = sbr.rel (0) target = $region25
    $region24: #{highway_maxout_forward.5} parent=1 // pred_region
      _
    $region25: #{highway_maxout_forward.5} parent=1 // pred_fallthru
      _
    %v27 = vld [vmem:[%s0] sm:$0xf]
    %v28 = vld [vmem:[%s2] sm:$0xff]
    %v29 = vld [vmem:[%s2 + $0x8] sm:$0xff]
    %v30 = vld [vmem:[%s2 + $0x10] sm:$0xff]
    %v31 = vld [vmem:[%s2 + $0x18] sm:$0xff]
    %v32 = vld [vmem:[%s2 + $0x20] sm:$0xff]
    %v33 = vld [vmem:[%s2 + $0x28] sm:$0xff]
    %v34 = vld [vmem:[%s2 + $0x30] sm:$0xff]
    %v35 = vld [vmem:[%s2 + $0x38] sm:$0xff]
    %v36 = vld [vmem:[%s2 + $0x40] sm:$0xff]
    %v37 = vld [vmem:[%s2 + $0x48] sm:$0xff]
    %v38 = vld [vmem:[%s2 + $0x50] sm:$0xff]
    %v39 = vld [vmem:[%s2 + $0x58] sm:$0xff]
    %v40 = vld [vmem:[%s2 + $0x60] sm:$0xff]
    %v41 = vld [vmem:[%s2 + $0x68] sm:$0xff]
    %v42 = vld [vmem:[%s2 + $0x70] sm:$0xff]
    %v43 = vld [vmem:[%s2 + $0x78] sm:$0xff]
    %v44 = vld [vmem:[%s2 + $0x80] sm:$0xff]
    %v45 = vld [vmem:[%s2 + $0x88] sm:$0xff]
    %v46 = vld [vmem:[%s2 + $0x90] sm:$0xff]
    %v47 = vld [vmem:[%s2 + $0x98] sm:$0xff]
    %v48 = vld [vmem:[%s3] sm:$0x1]
    %v50 = vlaneseq
    %v51 = vshrl.u32 %v50, 7
    %v52 = vsub.s32 0, %v51
    %v53 = vrot.slane %v48, %v52
    %v57 = vunpack.c.l.s4 1983009808
    %v58 = vunpack.c.0.s8 %v57
    %v59 = vlaneseq
    %v60 = vshrl.u32 %v59, 7
    %v61 = vsub.s32 %v58, %v60
    %v62 = vrot.slane %v27, %v61
    %v63 = vcombine.high %v62, %v62
    %vm65 = vcmask 261120
    %v66 = vsel %vm65, %v63, 0
    %68 = vmatprep.subr.mxu0 0.0
    %69 = vmatpush1.msra.mxu0 %v43
    %70 = vmatprep.subr.mxu0 0.0
    %71 = vmatpush1.msra.mxu0 %v42
    %72 = vmatprep.subr.mxu0 0.0
    %73 = vmatpush1.msra.mxu0 %v41
    %74 = vmatprep.subr.mxu0 0.0
    %75 = vmatpush1.msra.mxu0 %v40
    %76 = vmatprep.subr.mxu0 0.0
    %77 = vmatpush1.msra.mxu0 %v39
    %78 = vmatprep.subr.mxu0 0.0
    %79 = vmatpush1.msra.mxu0 %v38
    %80 = vmatprep.subr.mxu0 0.0
    %81 = vmatpush1.msra.mxu0 %v37
    %82 = vmatprep.subr.mxu0 0.0
    %83 = vmatpush1.msra.mxu0 %v36
    %84 = vmatprep.subr.mxu0 0.0
    %85 = vmatpush1.msra.mxu0 %v35
    %86 = vmatprep.subr.mxu0 0.0
    %87 = vmatpush1.msra.mxu0 %v34
    %88 = vmatprep.subr.mxu0 0.0
    %89 = vmatpush1.msra.mxu0 %v33
    %90 = vmatprep.subr.mxu0 0.0
    %91 = vmatpush1.msra.mxu0 %v32
    %92 = vmatprep.subr.mxu0 0.0
    %93 = vmatpush1.msra.mxu0 %v31
    %94 = vmatprep.subr.mxu0 0.0
    %95 = vmatpush1.msra.mxu0 %v30
    %96 = vmatprep.subr.mxu0 0.0
    %97 = vmatpush1.msra.mxu0 %v29
    %98 = vmatprep.subr.mxu0 0.0
    %99 = vmatpush1.msra.mxu0 %v28
    %100 = vmatprep.subr.mxu0 0.0
    %101 = vmatpush2.msra.mxu0 0.0
    %102 = vmatprep.subr.mxu0 0.0
    %103 = vmatpush2.msra.mxu0 0.0
    %104 = vmatprep.subr.mxu0 0.0
    %105 = vmatpush2.msra.mxu0 0.0
    %106 = vmatprep.subr.mxu0 0.0
    %107 = vmatpush2.msra.mxu0 0.0
    %108 = vmatprep.subr.mxu0 0.0
    %109 = vmatpush2.msra.mxu0 0.0
    %110 = vmatprep.subr.mxu0 0.0
    %111 = vmatpush2.msra.mxu0 0.0
    %112 = vmatprep.subr.mxu0 0.0
    %113 = vmatpush2.msra.mxu0 0.0
    %114 = vmatprep.subr.mxu0 0.0
    %115 = vmatpush2.msra.mxu0 0.0
    %116 = vmatprep.subr.mxu0 0.0
    %117 = vmatpush2.msra.mxu0 0.0
    %118 = vmatprep.subr.mxu0 0.0
    %119 = vmatpush2.msra.mxu0 0.0
    %120 = vmatprep.subr.mxu0 0.0
    %121 = vmatpush2.msra.mxu0 0.0
    %122 = vmatprep.subr.mxu0 0.0
    %123 = vmatpush2.msra.mxu0 0.0
    %124 = vmatprep.subr.mxu0 0.0
    %125 = vmatpush2.msra.mxu0 %v47
    %126 = vmatprep.subr.mxu0 0.0
    %127 = vmatpush2.msra.mxu0 %v46
    %128 = vmatprep.subr.mxu0 0.0
    %129 = vmatpush2.msra.mxu0 %v45
    %130 = vmatprep.subr.mxu0 0.0
    %131 = vmatpush2.msra.mxu0 %v44
    %132 = vmatprep.mubr.f32.mxu0 %v66
    %133 = vmatmul.mubr.f32.gmra.mxu0 %v62
    %v134 = vpop.f32.mrf.mxu0
    %v135 = vadd.f32 %v53, %v134
    %v136 = vpop.f32.mrf.mxu0
    %137 = vdwg.mxu0
    %v138 = vxor.u32 %v135, 2147483648
    %v139 = vmul.f32 %v138, 1.442695
    %v140 = vpow.pop %v139
    %v141 = vadd.f32 %v140, 1.0
    %v142 = vrcp.pop %v141
    %v143 = vmul.f32 1.0, %v142
    %v144 = vtanh.pop %v135
    %v145 = vld [vmem:[%s1] sm:$0x3]
    %147 = vrot.lane.b32.xlu0 %v145, 32
    %v148 = vpop.permute.xlu0 %147
    %v150 = vmul.f32 %v143, %v148
    %152 = vrot.lane.b32.xlu0 %v144, 64
    %v153 = vpop.permute.xlu0 %152
    %v155 = vmul.f32 %v143, %v153
    %157 = vrot.lane.b32.xlu0 %v155, 32
    %v158 = vpop.permute.xlu0 %157
    %v160 = vadd.f32 %v150, %v158
    %v161 = vtanh.pop %v160
    %163 = vrot.lane.b32.xlu0 %v161, 64
    %v164 = vpop.permute.xlu0 %163
    %v166 = vmul.f32 %v143, %v164
    %168 = vrot.lane.b32.xlu0 %v160, 96
    %v169 = vpop.permute.xlu0 %168
    %vm171 = vcmask 254976
    %172 = vst.msk [vmem:[#allocation4] sm:$0x3] %vm171, %v169
    %v173 = vld [vmem:[%s4] sm:$0xff]
    %v174 = vld [vmem:[%s4 + $0x8] sm:$0xff]
    %v175 = vld [vmem:[%s4 + $0x10] sm:$0xff]
    %v176 = vld [vmem:[%s4 + $0x18] sm:$0xff]
    %v177 = vld [vmem:[%s5] sm:$0x1]
    %v179 = vlaneseq
    %v180 = vshrl.u32 %v179, 7
    %v181 = vsub.s32 0, %v180
    %v182 = vrot.slane %v177, %v181
    %185 = vrot.lane.b32.xlu0 %v166, 32
    %v186 = vpop.permute.xlu0 %185
    %v187 = vsel %vm65, %v186, 0
    %189 = vmatprep.subr.mxu0 0.0
    %190 = vmatpush1.msra.mxu0 0.0
    %191 = vmatprep.subr.mxu0 0.0
    %192 = vmatpush1.msra.mxu0 0.0
    %193 = vmatprep.subr.mxu0 0.0
    %194 = vmatpush1.msra.mxu0 0.0
    %195 = vmatprep.subr.mxu0 0.0
    %196 = vmatpush1.msra.mxu0 0.0
    %197 = vmatprep.subr.mxu0 0.0
    %198 = vmatpush1.msra.mxu0 0.0
    %199 = vmatprep.subr.mxu0 0.0
    %200 = vmatpush1.msra.mxu0 0.0
    %201 = vmatprep.subr.mxu0 0.0
    %202 = vmatpush1.msra.mxu0 0.0
    %203 = vmatprep.subr.mxu0 0.0
    %204 = vmatpush1.msra.mxu0 0.0
    %205 = vmatprep.subr.mxu0 0.0
    %206 = vmatpush1.msra.mxu0 0.0
    %207 = vmatprep.subr.mxu0 0.0
    %208 = vmatpush1.msra.mxu0 0.0
    %209 = vmatprep.subr.mxu0 0.0
    %210 = vmatpush1.msra.mxu0 0.0
    %211 = vmatprep.subr.mxu0 0.0
    %212 = vmatpush1.msra.mxu0 0.0
    %213 = vmatprep.subr.mxu0 0.0
    %214 = vmatpush1.msra.mxu0 %v176
    %215 = vmatprep.subr.mxu0 0.0
    %216 = vmatpush1.msra.mxu0 %v175
    %217 = vmatprep.subr.mxu0 0.0
    %218 = vmatpush1.msra.mxu0 %v174
    %219 = vmatprep.subr.mxu0 0.0
    %220 = vmatpush1.msra.mxu0 %v173
    %221 = vmatprep.subr.mxu0 0.0
    %222 = vmatpush2.msra.mxu0 0.0
    %223 = vmatprep.subr.mxu0 0.0
    %224 = vmatpush2.msra.mxu0 0.0
    %225 = vmatprep.subr.mxu0 0.0
    %226 = vmatpush2.msra.mxu0 0.0
    %227 = vmatprep.subr.mxu0 0.0
    %228 = vmatpush2.msra.mxu0 0.0
    %229 = vmatprep.subr.mxu0 0.0
    %230 = vmatpush2.msra.mxu0 0.0
    %231 = vmatprep.subr.mxu0 0.0
    %232 = vmatpush2.msra.mxu0 0.0
    %233 = vmatprep.subr.mxu0 0.0
    %234 = vmatpush2.msra.mxu0 0.0
    %235 = vmatprep.subr.mxu0 0.0
    %236 = vmatpush2.msra.mxu0 0.0
    %237 = vmatprep.subr.mxu0 0.0
    %238 = vmatpush2.msra.mxu0 0.0
    %239 = vmatprep.subr.mxu0 0.0
    %240 = vmatpush2.msra.mxu0 0.0
    %241 = vmatprep.subr.mxu0 0.0
    %242 = vmatpush2.msra.mxu0 0.0
    %243 = vmatprep.subr.mxu0 0.0
    %244 = vmatpush2.msra.mxu0 0.0
    %245 = vmatprep.subr.mxu0 0.0
    %246 = vmatpush2.msra.mxu0 0.0
    %247 = vmatprep.subr.mxu0 0.0
    %248 = vmatpush2.msra.mxu0 0.0
    %249 = vmatprep.subr.mxu0 0.0
    %250 = vmatpush2.msra.mxu0 0.0
    %251 = vmatprep.subr.mxu0 0.0
    %252 = vmatpush2.msra.mxu0 0.0
    %253 = vmatprep.mubr.f32.mxu0 0.0
    %254 = vmatmul.mubr.f32.gmra.mxu0 %v187
    %v255 = vpop.f32.mrf.mxu0
    %v256 = vadd.f32 %v182, %v255
    %v257 = vpop.f32.mrf.mxu0
    %258 = vdwg.mxu0
    %259 = vst.msk [vmem:[#allocation2] sm:$0x3] %vm171, %v256
    // Predicated region
    $region26: #{highway_maxout_forward.5} parent=1 // pred_check
      _
    $region27: #{highway_maxout_forward.5} parent=1 // pred_check_branch
      %261 = sbr.rel (0) target = $region29
    $region28: #{highway_maxout_forward.5} parent=1 // pred_region
      %s263 = ssub.s32 32, 32
      %264 = vsyncadd [#allocation3], %s263
      %s266 = sshll.u32 [#allocation2], 4
      %s267 = int_to_ptr.vmem [resolvable:$true] %s266
      %269 = dma.vmem_to_hbm [thread:$0]  %s267, 32, %s6, [#allocation3]
    $region29: #{highway_maxout_forward.5} parent=1 // pred_fallthru
      _
    // Predicated region
    $region30: #{highway_maxout_forward.5} parent=1 // pred_check
      _
    $region31: #{highway_maxout_forward.5} parent=1 // pred_check_branch
      %271 = sbr.rel (0) target = $region33
    $region32: #{highway_maxout_forward.5} parent=1 // pred_region
      %s273 = ssub.s32 32, 32
      %274 = vsyncadd [#allocation5], %s273
      %s276 = sshll.u32 [#allocation4], 4
      %s277 = int_to_ptr.vmem [resolvable:$true] %s276
      %279 = dma.vmem_to_hbm [thread:$0]  %s277, 32, %s7, [#allocation5]
    $region33: #{highway_maxout_forward.5} parent=1 // pred_fallthru
      _
    // Predicated region
    $region34: #{highway_maxout_forward.5} parent=1 // pred_check
      _
    $region35: #{highway_maxout_forward.5} parent=1 // pred_check_branch
      %281 = sbr.rel (0) target = $region37
    $region36: #{highway_maxout_forward.5} parent=1 // pred_region
      %282 = dma.done [#allocation3], 32
    $region37: #{highway_maxout_forward.5} parent=1 // pred_fallthru
      _
    // Predicated region
    $region38: #{highway_maxout_forward.5} parent=1 // pred_check
      _
    $region39: #{highway_maxout_forward.5} parent=1 // pred_check_branch
      %284 = sbr.rel (0) target = $region41
    $region40: #{highway_maxout_forward.5} parent=1 // pred_region
      %285 = dma.done [#allocation5], 32
    $region41: #{highway_maxout_forward.5} parent=1 // pred_fallthru
      _
    %286 = vsyncpa [#allocation3], 1
    %287 = vsyncpa [#allocation5], 1

// kernel: highway_maxout_forward.4
$region0: #{highway_maxout_forward.4}
  #allocation0 [shape = 'u32[]', space=smem, size = 0x4, offset = 0x4, fixed_abs, tag = 'smem constant byte address 0x4 - core index']
  #allocation1 [shape = 'u32[144,128]{1,0:T(1,128)}', space=vmem, size = 0x12000, scoped, tag = 'internal scratch']
  %s0 = inlined_call_operand.vmem [shape: bf16[2,8,64], index: 0, kind: input, shape index: {}]
  %s1 = inlined_call_operand.vmem [shape: f32[2,1,512], index: 1, kind: input, shape index: {}]
  %s2 = inlined_call_operand.vmem [shape: bf16[64,512], index: 2, kind: input, shape index: {}]
  %s3 = inlined_call_operand.vmem [shape: bf16[128,256], index: 3, kind: input, shape index: {}]
  %s4 = inlined_call_operand.vmem [shape: f32[1,256], index: 4, kind: input, shape index: {}]
  %s5 = inlined_call_operand.vmem [shape: bf16[128,256], index: 5, kind: input, shape index: {}]
  %s6 = inlined_call_operand.vmem [shape: f32[1,256], index: 6, kind: input, shape index: {}]
  %s7 = inlined_call_operand.vmem [shape: bf16[256,2], index: 7, kind: input, shape index: {}]
  %s8 = inlined_call_operand.vmem [shape: f32[1,2], index: 8, kind: input, shape index: {}]
  %s9 = inlined_call_operand.vmem [shape: bf16[256,2], index: 9, kind: input, shape index: {}]
  %s10 = inlined_call_operand.vmem [shape: f32[1,2], index: 10, kind: input, shape index: {}]
  %s11 = inlined_call_operand.vmem [shape: f32[2,8,1], index: 11, kind: output, shape index: {0}]
  %s12 = inlined_call_operand.vmem [shape: f32[2,8,1], index: 12, kind: output, shape index: {1}]
  %13 = xla_tuple %s11, %s12
  %s14 = sld [smem:[#allocation0]]
  $region85: #{highway_maxout_forward.4} parent=0
    _
  %s16 = ssub.s32 1, %s14
  %s17 = scalar_select 0, %s16, %s14
  loop: start=0, step=1, limit=4
  $region2: #{highway_maxout_forward.4} parent=0 // loop_pre_header
    _
  $region3: #{highway_maxout_forward.4} parent=0 // loop_header
    %s19 = sphi 0, %s23
    %p20 = scmp.ge.s32.totalorder %s19, 4
    %s26 = sphi 0, %s38
    %s27 = sphi 0, %s34
    %s28 = sphi 0, %s26
    %s29 = sphi 0, %s27
    %s30 = sphi 0, %s28
    %s31 = sphi 0, %s29
    %s43 = sphi 0, %s45
    %s46 = sphi 0, %s43
    %s47 = sphi 0, %s46
    %s63 = sphi 0, %s47
    %s69 = sphi 0, %s71
    %s72 = sphi 0, %s69
    %s73 = sphi 0, %s72
    %s89 = sphi 0, %s73
    %s93 = sphi 0, %s93
    %s95 = sphi 0, %s93
    %s96 = sphi 0, %s95
    %s110 = sphi 0, %s96
    %s114 = sphi 0, %s114
    %s116 = sphi 0, %s114
    %s117 = sphi 0, %s116
    %s131 = sphi 0, %s117
    %s135 = sphi 0, %s135
    %s137 = sphi 0, %s135
    %s138 = sphi 0, %s137
    %s152 = sphi 0, %s138
    %s156 = sphi 0, %s156
    %s158 = sphi 0, %s156
    %s159 = sphi 0, %s158
    %s173 = sphi 0, %s159
    %s177 = sphi 0, %s177
    %s179 = sphi 0, %s177
    %s180 = sphi 0, %s179
    %s194 = sphi 0, %s180
    %s198 = sphi 0, %s198
    %s200 = sphi 0, %s198
    %s201 = sphi 0, %s200
    %s215 = sphi 0, %s201
    %s219 = sphi 0, %s219
    %s221 = sphi 0, %s219
    %s222 = sphi 0, %s221
    %s236 = sphi 0, %s222
    %s240 = sphi 0, %s240
    %s242 = sphi 0, %s240
    %s243 = sphi 0, %s242
    %s257 = sphi 0, %s243
    %s261 = sphi 0, %s261
    %s263 = sphi 0, %s261
    %s264 = sphi 0, %s263
    %s278 = sphi 0, %s264
    %s286 = sphi 0, %s288
    %s289 = sphi 0, %s286
    %s290 = sphi 0, %s289
    %s306 = sphi 0, %s290
    %s314 = sphi 0, %s316
    %s317 = sphi 0, %s314
    %s318 = sphi 0, %s317
    %s334 = sphi 0, %s318
  $region4: #{highway_maxout_forward.4} parent=0 // loop_header_branch
    %22 = sbr.rel (%p20) target = $region8
  $region5: #{highway_maxout_forward.4} parent=0 // loop_body
    %s24 = ssub.s32 %s19, 1
    %s25 = ssub.s32 %s19, 2
    %s32 = sadd.s32 1, %s27
    %p33 = scmp.ge.s32.totalorder %s32, 1
    %s34 = scalar_select %p33, 0, %s32
    %s35 = sadd.s32 1, %s26
    %s36 = scalar_select %p33, %s35, %s26
    %p37 = scmp.ge.s32.totalorder %s36, 2
    %s38 = scalar_select %p37, 0, %s36
    %s39 = ssub.s32 %s26, %s38
    %s40 = ssub.s32 %s27, %s34
    %s41 = sor.u32 %s39, %s40
    %p42 = scmp.eq.s32.totalorder %s41, 0
    %s44 = sadd.s32 %s43, 1
    %s45 = scalar_select %p42, %s43, %s44
    %p48 = pneg %p42
    %p49 = scmp.eq.s32.totalorder %s19, 1
    %p50 = por %p48, %p49
    %p51 = scmp.ne.s32.totalorder %s43, %s46
    %p52 = scmp.eq.s32.totalorder %s19, 0
    %p53 = por %p51, %p52
    %p54 = scmp.ne.s32.totalorder %s43, %s46
    %p55 = scmp.eq.s32.totalorder %s24, 1
    %p56 = por %p54, %p55
    %p57 = scmp.ne.s32.totalorder %s46, %s47
    %p58 = scmp.eq.s32.totalorder %s24, 0
    %p59 = por %p57, %p58
    %p60 = scmp.ne.s32.totalorder %s46, %s47
    %p61 = scmp.eq.s32.totalorder %s25, 1
    %p62 = por %p60, %p61
    %p64 = scmp.ne.s32.totalorder %s47, %s63
    %p65 = scmp.eq.s32.totalorder %s25, 0
    %p66 = por %p64, %p65
    %s67 = ssub.s32 %s26, %s38
    %p68 = scmp.eq.s32.totalorder %s67, 0
    %s70 = sadd.s32 %s69, 1
    %s71 = scalar_select %p68, %s69, %s70
    %p74 = pneg %p68
    %p75 = scmp.eq.s32.totalorder %s19, 1
    %p76 = por %p74, %p75
    %p77 = scmp.ne.s32.totalorder %s69, %s72
    %p78 = scmp.eq.s32.totalorder %s19, 0
    %p79 = por %p77, %p78
    %p80 = scmp.ne.s32.totalorder %s69, %s72
    %p81 = scmp.eq.s32.totalorder %s24, 1
    %p82 = por %p80, %p81
    %p83 = scmp.ne.s32.totalorder %s72, %s73
    %p84 = scmp.eq.s32.totalorder %s24, 0
    %p85 = por %p83, %p84
    %p86 = scmp.ne.s32.totalorder %s72, %s73
    %p87 = scmp.eq.s32.totalorder %s25, 1
    %p88 = por %p86, %p87
    %p90 = scmp.ne.s32.totalorder %s73, %s89
    %p91 = scmp.eq.s32.totalorder %s25, 0
    %p92 = por %p90, %p91
    %s94 = sadd.s32 %s93, 1
    %p97 = scmp.eq.s32.totalorder %s19, 1
    %p98 = scmp.ne.s32.totalorder %s93, %s95
    %p99 = scmp.eq.s32.totalorder %s19, 0
    %p100 = por %p98, %p99
    %p101 = scmp.ne.s32.totalorder %s93, %s95
    %p102 = scmp.eq.s32.totalorder %s24, 1
    %p103 = por %p101, %p102
    %p104 = scmp.ne.s32.totalorder %s95, %s96
    %p105 = scmp.eq.s32.totalorder %s24, 0
    %p106 = por %p104, %p105
    %p107 = scmp.ne.s32.totalorder %s95, %s96
    %p108 = scmp.eq.s32.totalorder %s25, 1
    %p109 = por %p107, %p108
    %p111 = scmp.ne.s32.totalorder %s96, %s110
    %p112 = scmp.eq.s32.totalorder %s25, 0
    %p113 = por %p111, %p112
    %s115 = sadd.s32 %s114, 1
    %p118 = scmp.eq.s32.totalorder %s19, 1
    %p119 = scmp.ne.s32.totalorder %s114, %s116
    %p120 = scmp.eq.s32.totalorder %s19, 0
    %p121 = por %p119, %p120
    %p122 = scmp.ne.s32.totalorder %s114, %s116
    %p123 = scmp.eq.s32.totalorder %s24, 1
    %p124 = por %p122, %p123
    %p125 = scmp.ne.s32.totalorder %s116, %s117
    %p126 = scmp.eq.s32.totalorder %s24, 0
    %p127 = por %p125, %p126
    %p128 = scmp.ne.s32.totalorder %s116, %s117
    %p129 = scmp.eq.s32.totalorder %s25, 1
    %p130 = por %p128, %p129
    %p132 = scmp.ne.s32.totalorder %s117, %s131
    %p133 = scmp.eq.s32.totalorder %s25, 0
    %p134 = por %p132, %p133
    %s136 = sadd.s32 %s135, 1
    %p139 = scmp.eq.s32.totalorder %s19, 1
    %p140 = scmp.ne.s32.totalorder %s135, %s137
    %p141 = scmp.eq.s32.totalorder %s19, 0
    %p142 = por %p140, %p141
    %p143 = scmp.ne.s32.totalorder %s135, %s137
    %p144 = scmp.eq.s32.totalorder %s24, 1
    %p145 = por %p143, %p144
    %p146 = scmp.ne.s32.totalorder %s137, %s138
    %p147 = scmp.eq.s32.totalorder %s24, 0
    %p148 = por %p146, %p147
    %p149 = scmp.ne.s32.totalorder %s137, %s138
    %p150 = scmp.eq.s32.totalorder %s25, 1
    %p151 = por %p149, %p150
    %p153 = scmp.ne.s32.totalorder %s138, %s152
    %p154 = scmp.eq.s32.totalorder %s25, 0
    %p155 = por %p153, %p154
    %s157 = sadd.s32 %s156, 1
    %p160 = scmp.eq.s32.totalorder %s19, 1
    %p161 = scmp.ne.s32.totalorder %s156, %s158
    %p162 = scmp.eq.s32.totalorder %s19, 0
    %p163 = por %p161, %p162
    %p164 = scmp.ne.s32.totalorder %s156, %s158
    %p165 = scmp.eq.s32.totalorder %s24, 1
    %p166 = por %p164, %p165
    %p167 = scmp.ne.s32.totalorder %s158, %s159
    %p168 = scmp.eq.s32.totalorder %s24, 0
    %p169 = por %p167, %p168
    %p170 = scmp.ne.s32.totalorder %s158, %s159
    %p171 = scmp.eq.s32.totalorder %s25, 1
    %p172 = por %p170, %p171
    %p174 = scmp.ne.s32.totalorder %s159, %s173
    %p175 = scmp.eq.s32.totalorder %s25, 0
    %p176 = por %p174, %p175
    %s178 = sadd.s32 %s177, 1
    %p181 = scmp.eq.s32.totalorder %s19, 1
    %p182 = scmp.ne.s32.totalorder %s177, %s179
    %p183 = scmp.eq.s32.totalorder %s19, 0
    %p184 = por %p182, %p183
    %p185 = scmp.ne.s32.totalorder %s177, %s179
    %p186 = scmp.eq.s32.totalorder %s24, 1
    %p187 = por %p185, %p186
    %p188 = scmp.ne.s32.totalorder %s179, %s180
    %p189 = scmp.eq.s32.totalorder %s24, 0
    %p190 = por %p188, %p189
    %p191 = scmp.ne.s32.totalorder %s179, %s180
    %p192 = scmp.eq.s32.totalorder %s25, 1
    %p193 = por %p191, %p192
    %p195 = scmp.ne.s32.totalorder %s180, %s194
    %p196 = scmp.eq.s32.totalorder %s25, 0
    %p197 = por %p195, %p196
    %s199 = sadd.s32 %s198, 1
    %p202 = scmp.eq.s32.totalorder %s19, 1
    %p203 = scmp.ne.s32.totalorder %s198, %s200
    %p204 = scmp.eq.s32.totalorder %s19, 0
    %p205 = por %p203, %p204
    %p206 = scmp.ne.s32.totalorder %s198, %s200
    %p207 = scmp.eq.s32.totalorder %s24, 1
    %p208 = por %p206, %p207
    %p209 = scmp.ne.s32.totalorder %s200, %s201
    %p210 = scmp.eq.s32.totalorder %s24, 0
    %p211 = por %p209, %p210
    %p212 = scmp.ne.s32.totalorder %s200, %s201
    %p213 = scmp.eq.s32.totalorder %s25, 1
    %p214 = por %p212, %p213
    %p216 = scmp.ne.s32.totalorder %s201, %s215
    %p217 = scmp.eq.s32.totalorder %s25, 0
    %p218 = por %p216, %p217
    %s220 = sadd.s32 %s219, 1
    %p223 = scmp.eq.s32.totalorder %s19, 1
    %p224 = scmp.ne.s32.totalorder %s219, %s221
    %p225 = scmp.eq.s32.totalorder %s19, 0
    %p226 = por %p224, %p225
    %p227 = scmp.ne.s32.totalorder %s219, %s221
    %p228 = scmp.eq.s32.totalorder %s24, 1
    %p229 = por %p227, %p228
    %p230 = scmp.ne.s32.totalorder %s221, %s222
    %p231 = scmp.eq.s32.totalorder %s24, 0
    %p232 = por %p230, %p231
    %p233 = scmp.ne.s32.totalorder %s221, %s222
    %p234 = scmp.eq.s32.totalorder %s25, 1
    %p235 = por %p233, %p234
    %p237 = scmp.ne.s32.totalorder %s222, %s236
    %p238 = scmp.eq.s32.totalorder %s25, 0
    %p239 = por %p237, %p238
    %s241 = sadd.s32 %s240, 1
    %p244 = scmp.eq.s32.totalorder %s19, 1
    %p245 = scmp.ne.s32.totalorder %s240, %s242
    %p246 = scmp.eq.s32.totalorder %s19, 0
    %p247 = por %p245, %p246
    %p248 = scmp.ne.s32.totalorder %s240, %s242
    %p249 = scmp.eq.s32.totalorder %s24, 1
    %p250 = por %p248, %p249
    %p251 = scmp.ne.s32.totalorder %s242, %s243
    %p252 = scmp.eq.s32.totalorder %s24, 0
    %p253 = por %p251, %p252
    %p254 = scmp.ne.s32.totalorder %s242, %s243
    %p255 = scmp.eq.s32.totalorder %s25, 1
    %p256 = por %p254, %p255
    %p258 = scmp.ne.s32.totalorder %s243, %s257
    %p259 = scmp.eq.s32.totalorder %s25, 0
    %p260 = por %p258, %p259
    %s262 = sadd.s32 %s261, 1
    %p265 = scmp.eq.s32.totalorder %s19, 1
    %p266 = scmp.ne.s32.totalorder %s261, %s263
    %p267 = scmp.eq.s32.totalorder %s19, 0
    %p268 = por %p266, %p267
    %p269 = scmp.ne.s32.totalorder %s261, %s263
    %p270 = scmp.eq.s32.totalorder %s24, 1
    %p271 = por %p269, %p270
    %p272 = scmp.ne.s32.totalorder %s263, %s264
    %p273 = scmp.eq.s32.totalorder %s24, 0
    %p274 = por %p272, %p273
    %p275 = scmp.ne.s32.totalorder %s263, %s264
    %p276 = scmp.eq.s32.totalorder %s25, 1
    %p277 = por %p275, %p276
    %p279 = scmp.ne.s32.totalorder %s264, %s278
    %p280 = scmp.eq.s32.totalorder %s25, 0
    %p281 = por %p279, %p280
    %s282 = ssub.s32 %s26, %s38
    %s283 = ssub.s32 %s27, %s34
    %s284 = sor.u32 %s282, %s283
    %p285 = scmp.eq.s32.totalorder %s284, 0
    %s287 = sadd.s32 %s286, 1
    %s288 = scalar_select %p285, %s286, %s287
    %p291 = pneg %p285
    %p292 = scmp.eq.s32.totalorder %s19, 1
    %p293 = por %p291, %p292
    %p294 = scmp.ne.s32.totalorder %s286, %s289
    %p295 = scmp.eq.s32.totalorder %s19, 0
    %p296 = por %p294, %p295
    %p297 = scmp.ne.s32.totalorder %s286, %s289
    %p298 = scmp.eq.s32.totalorder %s24, 1
    %p299 = por %p297, %p298
    %p300 = scmp.ne.s32.totalorder %s289, %s290
    %p301 = scmp.eq.s32.totalorder %s24, 0
    %p302 = por %p300, %p301
    %p303 = scmp.ne.s32.totalorder %s289, %s290
    %p304 = scmp.eq.s32.totalorder %s25, 1
    %p305 = por %p303, %p304
    %p307 = scmp.ne.s32.totalorder %s290, %s306
    %p308 = scmp.eq.s32.totalorder %s25, 0
    %p309 = por %p307, %p308
    %s310 = ssub.s32 %s26, %s38
    %s311 = ssub.s32 %s27, %s34
    %s312 = sor.u32 %s310, %s311
    %p313 = scmp.eq.s32.totalorder %s312, 0
    %s315 = sadd.s32 %s314, 1
    %s316 = scalar_select %p313, %s314, %s315
    %p319 = pneg %p313
    %p320 = scmp.eq.s32.totalorder %s19, 1
    %p321 = por %p319, %p320
    %p322 = scmp.ne.s32.totalorder %s314, %s317
    %p323 = scmp.eq.s32.totalorder %s19, 0
    %p324 = por %p322, %p323
    %p325 = scmp.ne.s32.totalorder %s314, %s317
    %p326 = scmp.eq.s32.totalorder %s24, 1
    %p327 = por %p325, %p326
    %p328 = scmp.ne.s32.totalorder %s317, %s318
    %p329 = scmp.eq.s32.totalorder %s24, 0
    %p330 = por %p328, %p329
    %p331 = scmp.ne.s32.totalorder %s317, %s318
    %p332 = scmp.eq.s32.totalorder %s25, 1
    %p333 = por %p331, %p332
    %p335 = scmp.ne.s32.totalorder %s318, %s334
    %p336 = scmp.eq.s32.totalorder %s25, 0
    %p337 = por %p335, %p336
    %p338 = scmp.le.s32.totalorder 1, %s19
    %p339 = scmp.lt.s32.totalorder %s19, 3
    %p340 = pnand %p338, %p339
    %p341 = pneg %p340
    // Predicated region
    $region9: #{highway_maxout_forward.4} parent=5 // pred_check
      _
    $region10: #{highway_maxout_forward.4} parent=5 // pred_check_branch
      %343 = sbr.rel (%p340) target = $region12
    $region11: #{highway_maxout_forward.4} parent=5 // pred_region
      %s344 = ssub.s32 %s19, 1
      // Predicated region
      $region13: #{highway_maxout_forward.4} parent=11 // pred_check
        %p345 = pneg %p106
      $region14: #{highway_maxout_forward.4} parent=11 // pred_check_branch
        %347 = sbr.rel (%p345) target = $region16
      $region15: #{highway_maxout_forward.4} parent=11 // pred_region
        _
      $region16: #{highway_maxout_forward.4} parent=11 // pred_fallthru
        _
      // Predicated region
      $region17: #{highway_maxout_forward.4} parent=11 // pred_check
        %p348 = pneg %p127
      $region18: #{highway_maxout_forward.4} parent=11 // pred_check_branch
        %350 = sbr.rel (%p348) target = $region20
      $region19: #{highway_maxout_forward.4} parent=11 // pred_region
        _
      $region20: #{highway_maxout_forward.4} parent=11 // pred_fallthru
        _
      // Predicated region
      $region21: #{highway_maxout_forward.4} parent=11 // pred_check
        %p351 = pneg %p148
      $region22: #{highway_maxout_forward.4} parent=11 // pred_check_branch
        %353 = sbr.rel (%p351) target = $region24
      $region23: #{highway_maxout_forward.4} parent=11 // pred_region
        _
      $region24: #{highway_maxout_forward.4} parent=11 // pred_fallthru
        _
      // Predicated region
      $region25: #{highway_maxout_forward.4} parent=11 // pred_check
        %p354 = pneg %p169
      $region26: #{highway_maxout_forward.4} parent=11 // pred_check_branch
        %356 = sbr.rel (%p354) target = $region28
      $region27: #{highway_maxout_forward.4} parent=11 // pred_region
        _
      $region28: #{highway_maxout_forward.4} parent=11 // pred_fallthru
        _
      // Predicated region
      $region29: #{highway_maxout_forward.4} parent=11 // pred_check
        %p357 = pneg %p190
      $region30: #{highway_maxout_forward.4} parent=11 // pred_check_branch
        %359 = sbr.rel (%p357) target = $region32
      $region31: #{highway_maxout_forward.4} parent=11 // pred_region
        _
      $region32: #{highway_maxout_forward.4} parent=11 // pred_fallthru
        _
      // Predicated region
      $region33: #{highway_maxout_forward.4} parent=11 // pred_check
        %p360 = pneg %p211
      $region34: #{highway_maxout_forward.4} parent=11 // pred_check_branch
        %362 = sbr.rel (%p360) target = $region36
      $region35: #{highway_maxout_forward.4} parent=11 // pred_region
        _
      $region36: #{highway_maxout_forward.4} parent=11 // pred_fallthru
        _
      // Predicated region
      $region37: #{highway_maxout_forward.4} parent=11 // pred_check
        %p363 = pneg %p232
      $region38: #{highway_maxout_forward.4} parent=11 // pred_check_branch
        %365 = sbr.rel (%p363) target = $region40
      $region39: #{highway_maxout_forward.4} parent=11 // pred_region
        _
      $region40: #{highway_maxout_forward.4} parent=11 // pred_fallthru
        _
      // Predicated region
      $region41: #{highway_maxout_forward.4} parent=11 // pred_check
        %p366 = pneg %p253
      $region42: #{highway_maxout_forward.4} parent=11 // pred_check_branch
        %368 = sbr.rel (%p366) target = $region44
      $region43: #{highway_maxout_forward.4} parent=11 // pred_region
        _
      $region44: #{highway_maxout_forward.4} parent=11 // pred_fallthru
        _
      // Predicated region
      $region45: #{highway_maxout_forward.4} parent=11 // pred_check
        %p369 = pneg %p274
      $region46: #{highway_maxout_forward.4} parent=11 // pred_check_branch
        %371 = sbr.rel (%p369) target = $region48
      $region47: #{highway_maxout_forward.4} parent=11 // pred_region
        _
      $region48: #{highway_maxout_forward.4} parent=11 // pred_fallthru
        _
    $region12: #{highway_maxout_forward.4} parent=5 // pred_fallthru
      _
    %p372 = scmp.lt.s32.totalorder %s19, 2
    // Predicated region
    $region49: #{highway_maxout_forward.4} parent=5 // pred_check
      %p373 = pneg %p372
    $region50: #{highway_maxout_forward.4} parent=5 // pred_check_branch
      %375 = sbr.rel (%p373) target = $region52
    $region51: #{highway_maxout_forward.4} parent=5 // pred_region
      // Predicated region
      $region53: #{highway_maxout_forward.4} parent=51 // pred_check
        %p376 = pneg %p53
      $region54: #{highway_maxout_forward.4} parent=51 // pred_check_branch
        %378 = sbr.rel (%p376) target = $region56
      $region55: #{highway_maxout_forward.4} parent=51 // pred_region
        %p379 = scmp.lt.s32.totalorder %s26, 1
        %s380 = scalar_select %p379, %s26, 1
        %p381 = scmp.lt.s32.totalorder %s27, 0
        %s382 = scalar_select %p381, %s27, 0
        %s383 = sadd.s32 %s382, %s380
        %s384 = smul.addr %s383, 4
        %s385 = scalar_lea.vmem %s0, %s384
      $region56: #{highway_maxout_forward.4} parent=51 // pred_fallthru
        _
      // Predicated region
      $region57: #{highway_maxout_forward.4} parent=51 // pred_check
        %p386 = pneg %p79
      $region58: #{highway_maxout_forward.4} parent=51 // pred_check_branch
        %388 = sbr.rel (%p386) target = $region60
      $region59: #{highway_maxout_forward.4} parent=51 // pred_region
        %p389 = scmp.lt.s32.totalorder %s26, 1
        %s390 = scalar_select %p389, %s26, 1
        %s391 = smul.addr %s390, 4
        %s392 = scalar_lea.vmem %s1, %s391
      $region60: #{highway_maxout_forward.4} parent=51 // pred_fallthru
        _
    $region52: #{highway_maxout_forward.4} parent=5 // pred_fallthru
      _
    %p393 = scmp.le.s32.totalorder 1, %s19
    %p394 = scmp.lt.s32.totalorder %s19, 3
    %p395 = pnand %p393, %p394
    %p396 = pneg %p395
    // Predicated region
    $region61: #{highway_maxout_forward.4} parent=5 // pred_check
      _
    $region62: #{highway_maxout_forward.4} parent=5 // pred_check_branch
      %398 = sbr.rel (%p395) target = $region64
    $region63: #{highway_maxout_forward.4} parent=5 // pred_region
      %s399 = ssub.s32 %s19, 1
      %p400 = scmp.lt.s32.totalorder %s28, 1
      %s401 = scalar_select %p400, %s28, 1
      %p402 = scmp.lt.s32.totalorder %s29, 0
      %s403 = scalar_select %p402, %s29, 0
      %s404 = sadd.s32 %s403, %s401
      %s405 = smul.addr %s404, 4
      %s406 = scalar_lea.vmem %s0, %s405
      %p407 = pneg %p59
      %p408 = pneg %p56
      %p409 = scmp.lt.s32.totalorder %s28, 1
      %s410 = scalar_select %p409, %s28, 1
      %s411 = smul.addr %s410, 4
      %s412 = scalar_lea.vmem %s1, %s411
      %p413 = pneg %p85
      %p414 = pneg %p82
      %p415 = pneg %p106
      %p416 = pneg %p103
      %p417 = pneg %p127
      %p418 = pneg %p124
      %p419 = pneg %p148
      %p420 = pneg %p145
      %p421 = pneg %p169
      %p422 = pneg %p166
      %p423 = pneg %p190
      %p424 = pneg %p187
      %p425 = pneg %p211
      %p426 = pneg %p208
      %p427 = pneg %p232
      %p428 = pneg %p229
      %p429 = pneg %p253
      %p430 = pneg %p250
      %p431 = pneg %p274
      %p432 = pneg %p271
      %p433 = pneg %p302
      %p434 = pneg %p299
      %p435 = scmp.lt.s32.totalorder %s28, 1
      %s436 = scalar_select %p435, %s28, 1
      %p437 = scmp.lt.s32.totalorder %s29, 0
      %s438 = scalar_select %p437, %s29, 0
      %s439 = sadd.s32 %s438, %s436
      %s440 = smul.addr %s439, 8
      %s441 = scalar_lea.vmem %s11, %s440
      %p442 = pneg %p330
      %p443 = pneg %p327
      %p444 = scmp.lt.s32.totalorder %s28, 1
      %s445 = scalar_select %p444, %s28, 1
      %p446 = scmp.lt.s32.totalorder %s29, 0
      %s447 = scalar_select %p446, %s29, 0
      %s448 = sadd.s32 %s447, %s445
      %s449 = smul.addr %s448, 8
      %s450 = scalar_lea.vmem %s12, %s449
      %p451 = scmp.lt.s32.totalorder %s28, 1
      %s452 = scalar_select %p451, %s28, 1
      %p453 = scmp.lt.s32.totalorder %s29, 0
      %s454 = scalar_select %p453, %s29, 0
      %s455 = sadd.s32 %s454, %s452
      %s456 = smul.addr %s455, 4
      %s457 = scalar_lea.vmem %s0, %s456
      %p458 = scmp.lt.s32.totalorder %s28, 1
      %s459 = scalar_select %p458, %s28, 1
      %s460 = smul.addr %s459, 4
      %s461 = scalar_lea.vmem %s1, %s460
      %p462 = scmp.lt.s32.totalorder %s28, 1
      %s463 = scalar_select %p462, %s28, 1
      %p464 = scmp.lt.s32.totalorder %s29, 0
      %s465 = scalar_select %p464, %s29, 0
      %s466 = sadd.s32 %s465, %s463
      %s467 = smul.addr %s466, 8
      %s468 = scalar_lea.vmem %s11, %s467
      %p469 = scmp.lt.s32.totalorder %s28, 1
      %s470 = scalar_select %p469, %s28, 1
      %p471 = scmp.lt.s32.totalorder %s29, 0
      %s472 = scalar_select %p471, %s29, 0
      %s473 = sadd.s32 %s472, %s470
      %s474 = smul.addr %s473, 8
      %s475 = scalar_lea.vmem %s12, %s474
      %v477 = vld [vmem:[%s457] sm:$0xf]
      %v478 = vld [vmem:[%s2] sm:$0xff]
      %v479 = vld [vmem:[%s2 + $0x8] sm:$0xff]
      %v480 = vld [vmem:[%s2 + $0x10] sm:$0xff]
      %v481 = vld [vmem:[%s2 + $0x18] sm:$0xff]
      %v482 = vld [vmem:[%s2 + $0x20] sm:$0xff]
      %v483 = vld [vmem:[%s2 + $0x28] sm:$0xff]
      %v484 = vld [vmem:[%s2 + $0x30] sm:$0xff]
      %v485 = vld [vmem:[%s2 + $0x38] sm:$0xff]
      %v486 = vld [vmem:[%s2 + $0x40] sm:$0xff]
      %v487 = vld [vmem:[%s2 + $0x48] sm:$0xff]
      %v488 = vld [vmem:[%s2 + $0x50] sm:$0xff]
      %v489 = vld [vmem:[%s2 + $0x58] sm:$0xff]
      %v490 = vld [vmem:[%s2 + $0x60] sm:$0xff]
      %v491 = vld [vmem:[%s2 + $0x68] sm:$0xff]
      %v492 = vld [vmem:[%s2 + $0x70] sm:$0xff]
      %v493 = vld [vmem:[%s2 + $0x78] sm:$0xff]
      %v494 = vld [vmem:[%s461] sm:$0xf]
      %v496 = vlaneseq
      %v497 = vshrl.u32 %v496, 7
      %v498 = vsub.s32 0, %v497
      %v499 = vrot.slane %v494, %v498
      %v500 = vlaneseq
      %v501 = vshrl.u32 %v500, 7
      %v502 = vsub.s32 1, %v501
      %v503 = vrot.slane %v494, %v502
      %v504 = vlaneseq
      %v505 = vshrl.u32 %v504, 7
      %v506 = vsub.s32 2, %v505
      %v507 = vrot.slane %v494, %v506
      %v508 = vlaneseq
      %v509 = vshrl.u32 %v508, 7
      %v510 = vsub.s32 3, %v509
      %v511 = vrot.slane %v494, %v510
      %v532 = vunpack.c.l.b16 %v478
      %v533 = vunpack.c.h.b16 %v478
      %v534 = vunpack.c.l.b16 %v479
      %v535 = vunpack.c.h.b16 %v479
      %v536 = vunpack.c.l.b16 %v480
      %v537 = vunpack.c.h.b16 %v480
      %v538 = vunpack.c.l.b16 %v481
      %v539 = vunpack.c.h.b16 %v481
      %v540 = vunpack.c.l.b16 %v482
      %v541 = vunpack.c.h.b16 %v482
      %v542 = vunpack.c.l.b16 %v483
      %v543 = vunpack.c.h.b16 %v483
      %v544 = vunpack.c.l.b16 %v484
      %v545 = vunpack.c.h.b16 %v484
      %v546 = vunpack.c.l.b16 %v485
      %v547 = vunpack.c.h.b16 %v485
      %v548 = vunpack.c.l.b16 %v486
      %v549 = vunpack.c.h.b16 %v486
      %v550 = vunpack.c.l.b16 %v487
      %v551 = vunpack.c.h.b16 %v487
      %v552 = vunpack.c.l.b16 %v488
      %v553 = vunpack.c.h.b16 %v488
      %v554 = vunpack.c.l.b16 %v489
      %v555 = vunpack.c.h.b16 %v489
      %v556 = vunpack.c.l.b16 %v490
      %v557 = vunpack.c.h.b16 %v490
      %v558 = vunpack.c.l.b16 %v491
      %v559 = vunpack.c.h.b16 %v491
      %v560 = vunpack.c.l.b16 %v492
      %v561 = vunpack.c.h.b16 %v492
      %v562 = vunpack.c.l.b16 %v493
      %v563 = vunpack.c.h.b16 %v493
      %v564 = vpack.c.b16 %v536, %v532
      %v565 = vpack.c.b16 %v537, %v533
      %v566 = vpack.c.b16 %v538, %v534
      %v567 = vpack.c.b16 %v539, %v535
      %v568 = vpack.c.b16 %v544, %v540
      %v569 = vpack.c.b16 %v545, %v541
      %v570 = vpack.c.b16 %v546, %v542
      %v571 = vpack.c.b16 %v547, %v543
      %v572 = vpack.c.b16 %v552, %v548
      %v573 = vpack.c.b16 %v553, %v549
      %v574 = vpack.c.b16 %v554, %v550
      %v575 = vpack.c.b16 %v555, %v551
      %v576 = vpack.c.b16 %v560, %v556
      %v577 = vpack.c.b16 %v561, %v557
      %v578 = vpack.c.b16 %v562, %v558
      %v579 = vpack.c.b16 %v563, %v559
      %vm596 = vcmask 523264
      %v598 = vsel %vm596, %v477, 0
      %600 = vmatprep.subr.bf16.mxu0 0
      %601 = vmatpush1.bf16.msra.mxu0 0
      %602 = vmatprep.subr.bf16.mxu0 0
      %603 = vmatpush1.bf16.msra.mxu0 0
      %604 = vmatprep.subr.bf16.mxu0 0
      %605 = vmatpush1.bf16.msra.mxu0 0
      %606 = vmatprep.subr.bf16.mxu0 0
      %607 = vmatpush1.bf16.msra.mxu0 0
      %608 = vmatprep.subr.bf16.mxu0 %v577
      %609 = vmatpush1.bf16.msra.mxu0 %v576
      %610 = vmatprep.subr.bf16.mxu0 %v573
      %611 = vmatpush1.bf16.msra.mxu0 %v572
      %612 = vmatprep.subr.bf16.mxu0 %v569
      %613 = vmatpush1.bf16.msra.mxu0 %v568
      %614 = vmatprep.subr.bf16.mxu0 %v565
      %615 = vmatpush1.bf16.msra.mxu0 %v564
      %616 = vmatprep.subr.bf16.mxu0 0
      %617 = vmatpush2.bf16.msra.mxu0 0
      %618 = vmatprep.subr.bf16.mxu0 0
      %619 = vmatpush2.bf16.msra.mxu0 0
      %620 = vmatprep.subr.bf16.mxu0 0
      %621 = vmatpush2.bf16.msra.mxu0 0
      %622 = vmatprep.subr.bf16.mxu0 0
      %623 = vmatpush2.bf16.msra.mxu0 0
      %624 = vmatprep.subr.bf16.mxu0 0
      %625 = vmatpush2.bf16.msra.mxu0 0
      %626 = vmatprep.subr.bf16.mxu0 0
      %627 = vmatpush2.bf16.msra.mxu0 0
      %628 = vmatprep.subr.bf16.mxu0 0
      %629 = vmatpush2.bf16.msra.mxu0 0
      %630 = vmatprep.subr.bf16.mxu0 0
      %631 = vmatpush2.bf16.msra.mxu0 0
      %632 = vmatprep.mubr.bf16.mxu0 0
      %633 = vmatmul.mubr.bf16.gmra.mxu0 %v598
      %v634 = vpop.f32.mrf.mxu0
      %v635 = vadd.f32 %v499, %v634
      %v636 = vpop.f32.mrf.mxu0
      %v637 = vadd.f32 %v503, %v636
      %v638 = vpop.f32.mrf.mxu0
      %v639 = vpop.f32.mrf.mxu0
      %640 = vdwg.mxu0
      %641 = vmatprep.subr.bf16.mxu0 0
      %642 = vmatpush1.bf16.msra.mxu0 0
      %643 = vmatprep.subr.bf16.mxu0 0
      %644 = vmatpush1.bf16.msra.mxu0 0
      %645 = vmatprep.subr.bf16.mxu0 0
      %646 = vmatpush1.bf16.msra.mxu0 0
      %647 = vmatprep.subr.bf16.mxu0 0
      %648 = vmatpush1.bf16.msra.mxu0 0
      %649 = vmatprep.subr.bf16.mxu0 %v579
      %650 = vmatpush1.bf16.msra.mxu0 %v578
      %651 = vmatprep.subr.bf16.mxu0 %v575
      %652 = vmatpush1.bf16.msra.mxu0 %v574
      %653 = vmatprep.subr.bf16.mxu0 %v571
      %654 = vmatpush1.bf16.msra.mxu0 %v570
      %655 = vmatprep.subr.bf16.mxu0 %v567
      %656 = vmatpush1.bf16.msra.mxu0 %v566
      %657 = vmatprep.subr.bf16.mxu0 0
      %658 = vmatpush2.bf16.msra.mxu0 0
      %659 = vmatprep.subr.bf16.mxu0 0
      %660 = vmatpush2.bf16.msra.mxu0 0
      %661 = vmatprep.subr.bf16.mxu0 0
      %662 = vmatpush2.bf16.msra.mxu0 0
      %663 = vmatprep.subr.bf16.mxu0 0
      %664 = vmatpush2.bf16.msra.mxu0 0
      %665 = vmatprep.subr.bf16.mxu0 0
      %666 = vmatpush2.bf16.msra.mxu0 0
      %667 = vmatprep.subr.bf16.mxu0 0
      %668 = vmatpush2.bf16.msra.mxu0 0
      %669 = vmatprep.subr.bf16.mxu0 0
      %670 = vmatpush2.bf16.msra.mxu0 0
      %671 = vmatprep.subr.bf16.mxu0 0
      %672 = vmatpush2.bf16.msra.mxu0 0
      %673 = vmatprep.mubr.bf16.mxu0 0
      %674 = vmatmul.mubr.bf16.gmra.mxu0 %v598
      %v675 = vpop.f32.mrf.mxu0
      %v676 = vadd.f32 %v507, %v675
      %v677 = vpop.f32.mrf.mxu0
      %v678 = vadd.f32 %v511, %v677
      %v679 = vpop.f32.mrf.mxu0
      %v680 = vpop.f32.mrf.mxu0
      %681 = vdwg.mxu0
      %v682 = vmax.f32 %v635, %v637
      %v683 = vmax.f32 %v676, %v678
      %v684 = vpack.c.bf16 %v682, %v682
      %v685 = vld [vmem:[%s3] sm:$0xff]
      %v686 = vld [vmem:[%s3 + $0x8] sm:$0xff]
      %v687 = vld [vmem:[%s3 + $0x10] sm:$0xff]
      %v688 = vld [vmem:[%s3 + $0x18] sm:$0xff]
      %v689 = vld [vmem:[%s3 + $0x20] sm:$0xff]
      %v690 = vld [vmem:[%s3 + $0x28] sm:$0xff]
      %v691 = vld [vmem:[%s3 + $0x30] sm:$0xff]
      %v692 = vld [vmem:[%s3 + $0x38] sm:$0xff]
      %v693 = vld [vmem:[%s3 + $0x40] sm:$0xff]
      %v694 = vld [vmem:[%s3 + $0x48] sm:$0xff]
      %v695 = vld [vmem:[%s3 + $0x50] sm:$0xff]
      %v696 = vld [vmem:[%s3 + $0x58] sm:$0xff]
      %v697 = vld [vmem:[%s3 + $0x60] sm:$0xff]
      %v698 = vld [vmem:[%s3 + $0x68] sm:$0xff]
      %v699 = vld [vmem:[%s3 + $0x70] sm:$0xff]
      %v700 = vld [vmem:[%s3 + $0x78] sm:$0xff]
      %v701 = vld [vmem:[%s4] sm:$0x3]
      %v703 = vlaneseq
      %v704 = vshrl.u32 %v703, 7
      %v705 = vsub.s32 0, %v704
      %v706 = vrot.slane %v701, %v705
      %v707 = vlaneseq
      %v708 = vshrl.u32 %v707, 7
      %v709 = vsub.s32 1, %v708
      %v710 = vrot.slane %v701, %v709
      %v729 = vunpack.c.l.b16 %v685
      %v730 = vunpack.c.h.b16 %v685
      %v731 = vunpack.c.l.b16 %v686
      %v732 = vunpack.c.h.b16 %v686
      %v733 = vunpack.c.l.b16 %v687
      %v734 = vunpack.c.h.b16 %v687
      %v735 = vunpack.c.l.b16 %v688
      %v736 = vunpack.c.h.b16 %v688
      %v737 = vunpack.c.l.b16 %v689
      %v738 = vunpack.c.h.b16 %v689
      %v739 = vunpack.c.l.b16 %v690
      %v740 = vunpack.c.h.b16 %v690
      %v741 = vunpack.c.l.b16 %v691
      %v742 = vunpack.c.h.b16 %v691
      %v743 = vunpack.c.l.b16 %v692
      %v744 = vunpack.c.h.b16 %v692
      %v745 = vunpack.c.l.b16 %v693
      %v746 = vunpack.c.h.b16 %v693
      %v747 = vunpack.c.l.b16 %v694
      %v748 = vunpack.c.h.b16 %v694
      %v749 = vunpack.c.l.b16 %v695
      %v750 = vunpack.c.h.b16 %v695
      %v751 = vunpack.c.l.b16 %v696
      %v752 = vunpack.c.h.b16 %v696
      %v753 = vunpack.c.l.b16 %v697
      %v754 = vunpack.c.h.b16 %v697
      %v755 = vunpack.c.l.b16 %v698
      %v756 = vunpack.c.h.b16 %v698
      %v757 = vunpack.c.l.b16 %v699
      %v758 = vunpack.c.h.b16 %v699
      %v759 = vunpack.c.l.b16 %v700
      %v760 = vunpack.c.h.b16 %v700
      %v761 = vpack.c.b16 %v731, %v729
      %v762 = vpack.c.b16 %v732, %v730
      %v763 = vpack.c.b16 %v735, %v733
      %v764 = vpack.c.b16 %v736, %v734
      %v765 = vpack.c.b16 %v739, %v737
      %v766 = vpack.c.b16 %v740, %v738
      %v767 = vpack.c.b16 %v743, %v741
      %v768 = vpack.c.b16 %v744, %v742
      %v769 = vpack.c.b16 %v747, %v745
      %v770 = vpack.c.b16 %v748, %v746
      %v771 = vpack.c.b16 %v751, %v749
      %v772 = vpack.c.b16 %v752, %v750
      %v773 = vpack.c.b16 %v755, %v753
      %v774 = vpack.c.b16 %v756, %v754
      %v775 = vpack.c.b16 %v759, %v757
      %v776 = vpack.c.b16 %v760, %v758
      %793 = vmatprep.subr.bf16.mxu0 %v776
      %794 = vmatpush1.bf16.msra.mxu0 %v775
      %795 = vmatprep.subr.bf16.mxu0 %v774
      %796 = vmatpush1.bf16.msra.mxu0 %v773
      %797 = vmatprep.subr.bf16.mxu0 %v772
      %798 = vmatpush1.bf16.msra.mxu0 %v771
      %799 = vmatprep.subr.bf16.mxu0 %v770
      %800 = vmatpush1.bf16.msra.mxu0 %v769
      %801 = vmatprep.subr.bf16.mxu0 %v768
      %802 = vmatpush1.bf16.msra.mxu0 %v767
      %803 = vmatprep.subr.bf16.mxu0 %v766
      %804 = vmatpush1.bf16.msra.mxu0 %v765
      %805 = vmatprep.subr.bf16.mxu0 %v764
      %806 = vmatpush1.bf16.msra.mxu0 %v763
      %807 = vmatprep.subr.bf16.mxu0 %v762
      %808 = vmatpush1.bf16.msra.mxu0 %v761
      %809 = vmatprep.subr.bf16.mxu0 0
      %810 = vmatpush2.bf16.msra.mxu0 0
      %811 = vmatprep.subr.bf16.mxu0 0
      %812 = vmatpush2.bf16.msra.mxu0 0
      %813 = vmatprep.subr.bf16.mxu0 0
      %814 = vmatpush2.bf16.msra.mxu0 0
      %815 = vmatprep.subr.bf16.mxu0 0
      %816 = vmatpush2.bf16.msra.mxu0 0
      %817 = vmatprep.subr.bf16.mxu0 0
      %818 = vmatpush2.bf16.msra.mxu0 0
      %819 = vmatprep.subr.bf16.mxu0 0
      %820 = vmatpush2.bf16.msra.mxu0 0
      %821 = vmatprep.subr.bf16.mxu0 0
      %822 = vmatpush2.bf16.msra.mxu0 0
      %823 = vmatprep.subr.bf16.mxu0 0
      %824 = vmatpush2.bf16.msra.mxu0 0
      %825 = vmatprep.mubr.bf16.mxu0 0
      %826 = vmatmul.mubr.bf16.gmra.mxu0 %v684
      %v827 = vpop.f32.mrf.mxu0
      %v828 = vadd.f32 %v706, %v827
      %v829 = vpop.f32.mrf.mxu0
      %v830 = vadd.f32 %v710, %v829
      %v831 = vpop.f32.mrf.mxu0
      %v832 = vpop.f32.mrf.mxu0
      %833 = vdwg.mxu0
      %v834 = vmax.f32 %v828, %v830
      %v835 = vpack.c.bf16 %v834, %v834
      %v836 = vld [vmem:[%s7] sm:$0xf]
      %v837 = vld [vmem:[%s7 + $0x4] sm:$0xf]
      %v838 = vld [vmem:[%s7 + $0x8] sm:$0xf]
      %v839 = vld [vmem:[%s7 + $0xc] sm:$0xf]
      %v840 = vld [vmem:[%s7 + $0x10] sm:$0xf]
      %v841 = vld [vmem:[%s7 + $0x14] sm:$0xf]
      %v842 = vld [vmem:[%s7 + $0x18] sm:$0xf]
      %v843 = vld [vmem:[%s7 + $0x1c] sm:$0xf]
      %v844 = vld [vmem:[%s7 + $0x20] sm:$0xf]
      %v845 = vld [vmem:[%s7 + $0x24] sm:$0xf]
      %v846 = vld [vmem:[%s7 + $0x28] sm:$0xf]
      %v847 = vld [vmem:[%s7 + $0x2c] sm:$0xf]
      %v848 = vld [vmem:[%s7 + $0x30] sm:$0xf]
      %v849 = vld [vmem:[%s7 + $0x34] sm:$0xf]
      %v850 = vld [vmem:[%s7 + $0x38] sm:$0xf]
      %v851 = vld [vmem:[%s7 + $0x3c] sm:$0xf]
      %v852 = vld [vmem:[%s7 + $0x40] sm:$0xf]
      %v853 = vld [vmem:[%s7 + $0x44] sm:$0xf]
      %v854 = vld [vmem:[%s7 + $0x48] sm:$0xf]
      %v855 = vld [vmem:[%s7 + $0x4c] sm:$0xf]
      %v856 = vld [vmem:[%s7 + $0x50] sm:$0xf]
      %v857 = vld [vmem:[%s7 + $0x54] sm:$0xf]
      %v858 = vld [vmem:[%s7 + $0x58] sm:$0xf]
      %v859 = vld [vmem:[%s7 + $0x5c] sm:$0xf]
      %v860 = vld [vmem:[%s7 + $0x60] sm:$0xf]
      %v861 = vld [vmem:[%s7 + $0x64] sm:$0xf]
      %v862 = vld [vmem:[%s7 + $0x68] sm:$0xf]
      %v863 = vld [vmem:[%s7 + $0x6c] sm:$0xf]
      %v864 = vld [vmem:[%s7 + $0x70] sm:$0xf]
      %v865 = vld [vmem:[%s7 + $0x74] sm:$0xf]
      %v866 = vld [vmem:[%s7 + $0x78] sm:$0xf]
      %v867 = vld [vmem:[%s7 + $0x7c] sm:$0xf]
      %v884 = vunpack.c.l.b16 %v852
      %v885 = vunpack.c.l.b16 %v853
      %v886 = vunpack.c.l.b16 %v854
      %v887 = vunpack.c.l.b16 %v855
      %v888 = vunpack.c.l.b16 %v856
      %v889 = vunpack.c.l.b16 %v857
      %v890 = vunpack.c.l.b16 %v858
      %v891 = vunpack.c.l.b16 %v859
      %v892 = vunpack.c.l.b16 %v860
      %v893 = vunpack.c.l.b16 %v861
      %v894 = vunpack.c.l.b16 %v862
      %v895 = vunpack.c.l.b16 %v863
      %v896 = vunpack.c.l.b16 %v864
      %v897 = vunpack.c.l.b16 %v865
      %v898 = vunpack.c.l.b16 %v866
      %v899 = vunpack.c.l.b16 %v867
      %v900 = vpack.c.b16 %v885, %v884
      %v901 = vpack.c.b16 %v887, %v886
      %v902 = vpack.c.b16 %v889, %v888
      %v903 = vpack.c.b16 %v891, %v890
      %v904 = vpack.c.b16 %v893, %v892
      %v905 = vpack.c.b16 %v895, %v894
      %v906 = vpack.c.b16 %v897, %v896
      %v907 = vpack.c.b16 %v899, %v898
      %916 = vmatprep.subr.bf16.mxu0 0
      %917 = vmatpush1.bf16.msra.mxu0 %v907
      %918 = vmatprep.subr.bf16.mxu0 0
      %919 = vmatpush1.bf16.msra.mxu0 %v906
      %920 = vmatprep.subr.bf16.mxu0 0
      %921 = vmatpush1.bf16.msra.mxu0 %v905
      %922 = vmatprep.subr.bf16.mxu0 0
      %923 = vmatpush1.bf16.msra.mxu0 %v904
      %924 = vmatprep.subr.bf16.mxu0 0
      %925 = vmatpush1.bf16.msra.mxu0 %v903
      %926 = vmatprep.subr.bf16.mxu0 0
      %927 = vmatpush1.bf16.msra.mxu0 %v902
      %928 = vmatprep.subr.bf16.mxu0 0
      %929 = vmatpush1.bf16.msra.mxu0 %v901
      %930 = vmatprep.subr.bf16.mxu0 0
      %931 = vmatpush1.bf16.msra.mxu0 %v900
      %932 = vmatprep.subr.bf16.mxu0 0
      %933 = vmatpush2.bf16.msra.mxu0 0
      %934 = vmatprep.subr.bf16.mxu0 0
      %935 = vmatpush2.bf16.msra.mxu0 0
      %936 = vmatprep.subr.bf16.mxu0 0
      %937 = vmatpush2.bf16.msra.mxu0 0
      %938 = vmatprep.subr.bf16.mxu0 0
      %939 = vmatpush2.bf16.msra.mxu0 0
      %940 = vmatprep.subr.bf16.mxu0 0
      %941 = vmatpush2.bf16.msra.mxu0 0
      %942 = vmatprep.subr.bf16.mxu0 0
      %943 = vmatpush2.bf16.msra.mxu0 0
      %944 = vmatprep.subr.bf16.mxu0 0
      %945 = vmatpush2.bf16.msra.mxu0 0
      %946 = vmatprep.subr.bf16.mxu0 0
      %947 = vmatpush2.bf16.msra.mxu0 0
      %948 = vmatprep.mubr.bf16.mxu0 0
      %949 = vmatmul.mubr.bf16.gmra.mxu0 %v835
      %v950 = vpop.f32.mrf.mxu0
      %v951 = vadd.f32 0.0, %v950
      %v952 = vpop.f32.mrf.mxu0
      %v953 = vpop.f32.mrf.mxu0
      %v954 = vpop.f32.mrf.mxu0
      %955 = vdwg.mxu0
      %v972 = vunpack.c.l.b16 %v836
      %v973 = vunpack.c.l.b16 %v837
      %v974 = vunpack.c.l.b16 %v838
      %v975 = vunpack.c.l.b16 %v839
      %v976 = vunpack.c.l.b16 %v840
      %v977 = vunpack.c.l.b16 %v841
      %v978 = vunpack.c.l.b16 %v842
      %v979 = vunpack.c.l.b16 %v843
      %v980 = vunpack.c.l.b16 %v844
      %v981 = vunpack.c.l.b16 %v845
      %v982 = vunpack.c.l.b16 %v846
      %v983 = vunpack.c.l.b16 %v847
      %v984 = vunpack.c.l.b16 %v848
      %v985 = vunpack.c.l.b16 %v849
      %v986 = vunpack.c.l.b16 %v850
      %v987 = vunpack.c.l.b16 %v851
      %v988 = vpack.c.b16 %v973, %v972
      %v989 = vpack.c.b16 %v975, %v974
      %v990 = vpack.c.b16 %v977, %v976
      %v991 = vpack.c.b16 %v979, %v978
      %v992 = vpack.c.b16 %v981, %v980
      %v993 = vpack.c.b16 %v983, %v982
      %v994 = vpack.c.b16 %v985, %v984
      %v995 = vpack.c.b16 %v987, %v986
      %1004 = vmatprep.subr.bf16.mxu0 0
      %1005 = vmatpush1.bf16.msra.mxu0 %v995
      %1006 = vmatprep.subr.bf16.mxu0 0
      %1007 = vmatpush1.bf16.msra.mxu0 %v994
      %1008 = vmatprep.subr.bf16.mxu0 0
      %1009 = vmatpush1.bf16.msra.mxu0 %v993
      %1010 = vmatprep.subr.bf16.mxu0 0
      %1011 = vmatpush1.bf16.msra.mxu0 %v992
      %1012 = vmatprep.subr.bf16.mxu0 0
      %1013 = vmatpush1.bf16.msra.mxu0 %v991
      %1014 = vmatprep.subr.bf16.mxu0 0
      %1015 = vmatpush1.bf16.msra.mxu0 %v990
      %1016 = vmatprep.subr.bf16.mxu0 0
      %1017 = vmatpush1.bf16.msra.mxu0 %v989
      %1018 = vmatprep.subr.bf16.mxu0 0
      %1019 = vmatpush1.bf16.msra.mxu0 %v988
      %1020 = vmatprep.subr.bf16.mxu0 0
      %1021 = vmatpush2.bf16.msra.mxu0 0
      %1022 = vmatprep.subr.bf16.mxu0 0
      %1023 = vmatpush2.bf16.msra.mxu0 0
      %1024 = vmatprep.subr.bf16.mxu0 0
      %1025 = vmatpush2.bf16.msra.mxu0 0
      %1026 = vmatprep.subr.bf16.mxu0 0
      %1027 = vmatpush2.bf16.msra.mxu0 0
      %1028 = vmatprep.subr.bf16.mxu0 0
      %1029 = vmatpush2.bf16.msra.mxu0 0
      %1030 = vmatprep.subr.bf16.mxu0 0
      %1031 = vmatpush2.bf16.msra.mxu0 0
      %1032 = vmatprep.subr.bf16.mxu0 0
      %1033 = vmatpush2.bf16.msra.mxu0 0
      %1034 = vmatprep.subr.bf16.mxu0 0
      %1035 = vmatpush2.bf16.msra.mxu0 0
      %1036 = vmatprep.mubr.bf16.mxu0 0
      %1037 = vmatmul.mubr.bf16.gmra.mxu0 %v684
      %v1038 = vpop.f32.mrf.mxu0
      %v1039 = vadd.f32 %v951, %v1038
      %v1040 = vpop.f32.mrf.mxu0
      %v1041 = vpop.f32.mrf.mxu0
      %v1042 = vpop.f32.mrf.mxu0
      %1043 = vdwg.mxu0
      %v1044 = vld [vmem:[%s8] sm:$0x1]
      %v1046 = vlaneseq
      %v1047 = vshrl.u32 %v1046, 7
      %v1048 = vsub.s32 0, %v1047
      %v1049 = vrot.slane %v1044, %v1048
      %v1051 = vadd.f32 %v1039, %v1049
      %vm1052 = vcmask 15360
      %v1053 = vsel %vm1052, %v1051, -inf
      %1054 = vmax.xlane.f32.xlu0 %v1053
      %v1055 = vpop.xlane.xlu0 %1054
      %vm1056 = vcmask 7168
      %1057 = vst.msk [vmem:[%s468] sm:$0xff] %vm1056, %v1055
      %v1058 = vpack.c.bf16 %v683, %v683
      %v1059 = vld [vmem:[%s5] sm:$0xff]
      %v1060 = vld [vmem:[%s5 + $0x8] sm:$0xff]
      %v1061 = vld [vmem:[%s5 + $0x10] sm:$0xff]
      %v1062 = vld [vmem:[%s5 + $0x18] sm:$0xff]
      %v1063 = vld [vmem:[%s5 + $0x20] sm:$0xff]
      %v1064 = vld [vmem:[%s5 + $0x28] sm:$0xff]
      %v1065 = vld [vmem:[%s5 + $0x30] sm:$0xff]
      %v1066 = vld [vmem:[%s5 + $0x38] sm:$0xff]
      %v1067 = vld [vmem:[%s5 + $0x40] sm:$0xff]
      %v1068 = vld [vmem:[%s5 + $0x48] sm:$0xff]
      %v1069 = vld [vmem:[%s5 + $0x50] sm:$0xff]
      %v1070 = vld [vmem:[%s5 + $0x58] sm:$0xff]
      %v1071 = vld [vmem:[%s5 + $0x60] sm:$0xff]
      %v1072 = vld [vmem:[%s5 + $0x68] sm:$0xff]
      %v1073 = vld [vmem:[%s5 + $0x70] sm:$0xff]
      %v1074 = vld [vmem:[%s5 + $0x78] sm:$0xff]
      %v1075 = vld [vmem:[%s6] sm:$0x3]
      %v1077 = vlaneseq
      %v1078 = vshrl.u32 %v1077, 7
      %v1079 = vsub.s32 0, %v1078
      %v1080 = vrot.slane %v1075, %v1079
      %v1081 = vlaneseq
      %v1082 = vshrl.u32 %v1081, 7
      %v1083 = vsub.s32 1, %v1082
      %v1084 = vrot.slane %v1075, %v1083
      %v1103 = vunpack.c.l.b16 %v1059
      %v1104 = vunpack.c.h.b16 %v1059
      %v1105 = vunpack.c.l.b16 %v1060
      %v1106 = vunpack.c.h.b16 %v1060
      %v1107 = vunpack.c.l.b16 %v1061
      %v1108 = vunpack.c.h.b16 %v1061
      %v1109 = vunpack.c.l.b16 %v1062
      %v1110 = vunpack.c.h.b16 %v1062
      %v1111 = vunpack.c.l.b16 %v1063
      %v1112 = vunpack.c.h.b16 %v1063
      %v1113 = vunpack.c.l.b16 %v1064
      %v1114 = vunpack.c.h.b16 %v1064
      %v1115 = vunpack.c.l.b16 %v1065
      %v1116 = vunpack.c.h.b16 %v1065
      %v1117 = vunpack.c.l.b16 %v1066
      %v1118 = vunpack.c.h.b16 %v1066
      %v1119 = vunpack.c.l.b16 %v1067
      %v1120 = vunpack.c.h.b16 %v1067
      %v1121 = vunpack.c.l.b16 %v1068
      %v1122 = vunpack.c.h.b16 %v1068
      %v1123 = vunpack.c.l.b16 %v1069
      %v1124 = vunpack.c.h.b16 %v1069
      %v1125 = vunpack.c.l.b16 %v1070
      %v1126 = vunpack.c.h.b16 %v1070
      %v1127 = vunpack.c.l.b16 %v1071
      %v1128 = vunpack.c.h.b16 %v1071
      %v1129 = vunpack.c.l.b16 %v1072
      %v1130 = vunpack.c.h.b16 %v1072
      %v1131 = vunpack.c.l.b16 %v1073
      %v1132 = vunpack.c.h.b16 %v1073
      %v1133 = vunpack.c.l.b16 %v1074
      %v1134 = vunpack.c.h.b16 %v1074
      %v1135 = vpack.c.b16 %v1105, %v1103
      %v1136 = vpack.c.b16 %v1106, %v1104
      %v1137 = vpack.c.b16 %v1109, %v1107
      %v1138 = vpack.c.b16 %v1110, %v1108
      %v1139 = vpack.c.b16 %v1113, %v1111
      %v1140 = vpack.c.b16 %v1114, %v1112
      %v1141 = vpack.c.b16 %v1117, %v1115
      %v1142 = vpack.c.b16 %v1118, %v1116
      %v1143 = vpack.c.b16 %v1121, %v1119
      %v1144 = vpack.c.b16 %v1122, %v1120
      %v1145 = vpack.c.b16 %v1125, %v1123
      %v1146 = vpack.c.b16 %v1126, %v1124
      %v1147 = vpack.c.b16 %v1129, %v1127
      %v1148 = vpack.c.b16 %v1130, %v1128
      %v1149 = vpack.c.b16 %v1133, %v1131
      %v1150 = vpack.c.b16 %v1134, %v1132
      %1167 = vmatprep.subr.bf16.mxu0 %v1150
      %1168 = vmatpush1.bf16.msra.mxu0 %v1149
      %1169 = vmatprep.subr.bf16.mxu0 %v1148
      %1170 = vmatpush1.bf16.msra.mxu0 %v1147
      %1171 = vmatprep.subr.bf16.mxu0 %v1146
      %1172 = vmatpush1.bf16.msra.mxu0 %v1145
      %1173 = vmatprep.subr.bf16.mxu0 %v1144
      %1174 = vmatpush1.bf16.msra.mxu0 %v1143
      %1175 = vmatprep.subr.bf16.mxu0 %v1142
      %1176 = vmatpush1.bf16.msra.mxu0 %v1141
      %1177 = vmatprep.subr.bf16.mxu0 %v1140
      %1178 = vmatpush1.bf16.msra.mxu0 %v1139
      %1179 = vmatprep.subr.bf16.mxu0 %v1138
      %1180 = vmatpush1.bf16.msra.mxu0 %v1137
      %1181 = vmatprep.subr.bf16.mxu0 %v1136
      %1182 = vmatpush1.bf16.msra.mxu0 %v1135
      %1183 = vmatprep.subr.bf16.mxu0 0
      %1184 = vmatpush2.bf16.msra.mxu0 0
      %1185 = vmatprep.subr.bf16.mxu0 0
      %1186 = vmatpush2.bf16.msra.mxu0 0
      %1187 = vmatprep.subr.bf16.mxu0 0
      %1188 = vmatpush2.bf16.msra.mxu0 0
      %1189 = vmatprep.subr.bf16.mxu0 0
      %1190 = vmatpush2.bf16.msra.mxu0 0
      %1191 = vmatprep.subr.bf16.mxu0 0
      %1192 = vmatpush2.bf16.msra.mxu0 0
      %1193 = vmatprep.subr.bf16.mxu0 0
      %1194 = vmatpush2.bf16.msra.mxu0 0
      %1195 = vmatprep.subr.bf16.mxu0 0
      %1196 = vmatpush2.bf16.msra.mxu0 0
      %1197 = vmatprep.subr.bf16.mxu0 0
      %1198 = vmatpush2.bf16.msra.mxu0 0
      %1199 = vmatprep.mubr.bf16.mxu0 0
      %1200 = vmatmul.mubr.bf16.gmra.mxu0 %v1058
      %v1201 = vpop.f32.mrf.mxu0
      %v1202 = vadd.f32 %v1080, %v1201
      %v1203 = vpop.f32.mrf.mxu0
      %v1204 = vadd.f32 %v1084, %v1203
      %v1205 = vpop.f32.mrf.mxu0
      %v1206 = vpop.f32.mrf.mxu0
      %1207 = vdwg.mxu0
      %v1208 = vmax.f32 %v1202, %v1204
      %v1209 = vpack.c.bf16 %v1208, %v1208
      %v1210 = vld [vmem:[%s9] sm:$0xf]
      %v1211 = vld [vmem:[%s9 + $0x4] sm:$0xf]
      %v1212 = vld [vmem:[%s9 + $0x8] sm:$0xf]
      %v1213 = vld [vmem:[%s9 + $0xc] sm:$0xf]
      %v1214 = vld [vmem:[%s9 + $0x10] sm:$0xf]
      %v1215 = vld [vmem:[%s9 + $0x14] sm:$0xf]
      %v1216 = vld [vmem:[%s9 + $0x18] sm:$0xf]
      %v1217 = vld [vmem:[%s9 + $0x1c] sm:$0xf]
      %v1218 = vld [vmem:[%s9 + $0x20] sm:$0xf]
      %v1219 = vld [vmem:[%s9 + $0x24] sm:$0xf]
      %v1220 = vld [vmem:[%s9 + $0x28] sm:$0xf]
      %v1221 = vld [vmem:[%s9 + $0x2c] sm:$0xf]
      %v1222 = vld [vmem:[%s9 + $0x30] sm:$0xf]
      %v1223 = vld [vmem:[%s9 + $0x34] sm:$0xf]
      %v1224 = vld [vmem:[%s9 + $0x38] sm:$0xf]
      %v1225 = vld [vmem:[%s9 + $0x3c] sm:$0xf]
      %v1226 = vld [vmem:[%s9 + $0x40] sm:$0xf]
      %v1227 = vld [vmem:[%s9 + $0x44] sm:$0xf]
      %v1228 = vld [vmem:[%s9 + $0x48] sm:$0xf]
      %v1229 = vld [vmem:[%s9 + $0x4c] sm:$0xf]
      %v1230 = vld [vmem:[%s9 + $0x50] sm:$0xf]
      %v1231 = vld [vmem:[%s9 + $0x54] sm:$0xf]
      %v1232 = vld [vmem:[%s9 + $0x58] sm:$0xf]
      %v1233 = vld [vmem:[%s9 + $0x5c] sm:$0xf]
      %v1234 = vld [vmem:[%s9 + $0x60] sm:$0xf]
      %v1235 = vld [vmem:[%s9 + $0x64] sm:$0xf]
      %v1236 = vld [vmem:[%s9 + $0x68] sm:$0xf]
      %v1237 = vld [vmem:[%s9 + $0x6c] sm:$0xf]
      %v1238 = vld [vmem:[%s9 + $0x70] sm:$0xf]
      %v1239 = vld [vmem:[%s9 + $0x74] sm:$0xf]
      %v1240 = vld [vmem:[%s9 + $0x78] sm:$0xf]
      %v1241 = vld [vmem:[%s9 + $0x7c] sm:$0xf]
      %v1258 = vunpack.c.l.b16 %v1226
      %v1259 = vunpack.c.l.b16 %v1227
      %v1260 = vunpack.c.l.b16 %v1228
      %v1261 = vunpack.c.l.b16 %v1229
      %v1262 = vunpack.c.l.b16 %v1230
      %v1263 = vunpack.c.l.b16 %v1231
      %v1264 = vunpack.c.l.b16 %v1232
      %v1265 = vunpack.c.l.b16 %v1233
      %v1266 = vunpack.c.l.b16 %v1234
      %v1267 = vunpack.c.l.b16 %v1235
      %v1268 = vunpack.c.l.b16 %v1236
      %v1269 = vunpack.c.l.b16 %v1237
      %v1270 = vunpack.c.l.b16 %v1238
      %v1271 = vunpack.c.l.b16 %v1239
      %v1272 = vunpack.c.l.b16 %v1240
      %v1273 = vunpack.c.l.b16 %v1241
      %v1274 = vpack.c.b16 %v1259, %v1258
      %v1275 = vpack.c.b16 %v1261, %v1260
      %v1276 = vpack.c.b16 %v1263, %v1262
      %v1277 = vpack.c.b16 %v1265, %v1264
      %v1278 = vpack.c.b16 %v1267, %v1266
      %v1279 = vpack.c.b16 %v1269, %v1268
      %v1280 = vpack.c.b16 %v1271, %v1270
      %v1281 = vpack.c.b16 %v1273, %v1272
      %1290 = vmatprep.subr.bf16.mxu0 0
      %1291 = vmatpush1.bf16.msra.mxu0 %v1281
      %1292 = vmatprep.subr.bf16.mxu0 0
      %1293 = vmatpush1.bf16.msra.mxu0 %v1280
      %1294 = vmatprep.subr.bf16.mxu0 0
      %1295 = vmatpush1.bf16.msra.mxu0 %v1279
      %1296 = vmatprep.subr.bf16.mxu0 0
      %1297 = vmatpush1.bf16.msra.mxu0 %v1278
      %1298 = vmatprep.subr.bf16.mxu0 0
      %1299 = vmatpush1.bf16.msra.mxu0 %v1277
      %1300 = vmatprep.subr.bf16.mxu0 0
      %1301 = vmatpush1.bf16.msra.mxu0 %v1276
      %1302 = vmatprep.subr.bf16.mxu0 0
      %1303 = vmatpush1.bf16.msra.mxu0 %v1275
      %1304 = vmatprep.subr.bf16.mxu0 0
      %1305 = vmatpush1.bf16.msra.mxu0 %v1274
      %1306 = vmatprep.subr.bf16.mxu0 0
      %1307 = vmatpush2.bf16.msra.mxu0 0
      %1308 = vmatprep.subr.bf16.mxu0 0
      %1309 = vmatpush2.bf16.msra.mxu0 0
      %1310 = vmatprep.subr.bf16.mxu0 0
      %1311 = vmatpush2.bf16.msra.mxu0 0
      %1312 = vmatprep.subr.bf16.mxu0 0
      %1313 = vmatpush2.bf16.msra.mxu0 0
      %1314 = vmatprep.subr.bf16.mxu0 0
      %1315 = vmatpush2.bf16.msra.mxu0 0
      %1316 = vmatprep.subr.bf16.mxu0 0
      %1317 = vmatpush2.bf16.msra.mxu0 0
      %1318 = vmatprep.subr.bf16.mxu0 0
      %1319 = vmatpush2.bf16.msra.mxu0 0
      %1320 = vmatprep.subr.bf16.mxu0 0
      %1321 = vmatpush2.bf16.msra.mxu0 0
      %1322 = vmatprep.mubr.bf16.mxu0 0
      %1323 = vmatmul.mubr.bf16.gmra.mxu0 %v1209
      %v1324 = vpop.f32.mrf.mxu0
      %v1325 = vadd.f32 0.0, %v1324
      %v1326 = vpop.f32.mrf.mxu0
      %v1327 = vpop.f32.mrf.mxu0
      %v1328 = vpop.f32.mrf.mxu0
      %1329 = vdwg.mxu0
      %v1346 = vunpack.c.l.b16 %v1210
      %v1347 = vunpack.c.l.b16 %v1211
      %v1348 = vunpack.c.l.b16 %v1212
      %v1349 = vunpack.c.l.b16 %v1213
      %v1350 = vunpack.c.l.b16 %v1214
      %v1351 = vunpack.c.l.b16 %v1215
      %v1352 = vunpack.c.l.b16 %v1216
      %v1353 = vunpack.c.l.b16 %v1217
      %v1354 = vunpack.c.l.b16 %v1218
      %v1355 = vunpack.c.l.b16 %v1219
      %v1356 = vunpack.c.l.b16 %v1220
      %v1357 = vunpack.c.l.b16 %v1221
      %v1358 = vunpack.c.l.b16 %v1222
      %v1359 = vunpack.c.l.b16 %v1223
      %v1360 = vunpack.c.l.b16 %v1224
      %v1361 = vunpack.c.l.b16 %v1225
      %v1362 = vpack.c.b16 %v1347, %v1346
      %v1363 = vpack.c.b16 %v1349, %v1348
      %v1364 = vpack.c.b16 %v1351, %v1350
      %v1365 = vpack.c.b16 %v1353, %v1352
      %v1366 = vpack.c.b16 %v1355, %v1354
      %v1367 = vpack.c.b16 %v1357, %v1356
      %v1368 = vpack.c.b16 %v1359, %v1358
      %v1369 = vpack.c.b16 %v1361, %v1360
      %1378 = vmatprep.subr.bf16.mxu0 0
      %1379 = vmatpush1.bf16.msra.mxu0 %v1369
      %1380 = vmatprep.subr.bf16.mxu0 0
      %1381 = vmatpush1.bf16.msra.mxu0 %v1368
      %1382 = vmatprep.subr.bf16.mxu0 0
      %1383 = vmatpush1.bf16.msra.mxu0 %v1367
      %1384 = vmatprep.subr.bf16.mxu0 0
      %1385 = vmatpush1.bf16.msra.mxu0 %v1366
      %1386 = vmatprep.subr.bf16.mxu0 0
      %1387 = vmatpush1.bf16.msra.mxu0 %v1365
      %1388 = vmatprep.subr.bf16.mxu0 0
      %1389 = vmatpush1.bf16.msra.mxu0 %v1364
      %1390 = vmatprep.subr.bf16.mxu0 0
      %1391 = vmatpush1.bf16.msra.mxu0 %v1363
      %1392 = vmatprep.subr.bf16.mxu0 0
      %1393 = vmatpush1.bf16.msra.mxu0 %v1362
      %1394 = vmatprep.subr.bf16.mxu0 0
      %1395 = vmatpush2.bf16.msra.mxu0 0
      %1396 = vmatprep.subr.bf16.mxu0 0
      %1397 = vmatpush2.bf16.msra.mxu0 0
      %1398 = vmatprep.subr.bf16.mxu0 0
      %1399 = vmatpush2.bf16.msra.mxu0 0
      %1400 = vmatprep.subr.bf16.mxu0 0
      %1401 = vmatpush2.bf16.msra.mxu0 0
      %1402 = vmatprep.subr.bf16.mxu0 0
      %1403 = vmatpush2.bf16.msra.mxu0 0
      %1404 = vmatprep.subr.bf16.mxu0 0
      %1405 = vmatpush2.bf16.msra.mxu0 0
      %1406 = vmatprep.subr.bf16.mxu0 0
      %1407 = vmatpush2.bf16.msra.mxu0 0
      %1408 = vmatprep.subr.bf16.mxu0 0
      %1409 = vmatpush2.bf16.msra.mxu0 0
      %1410 = vmatprep.mubr.bf16.mxu0 0
      %1411 = vmatmul.mubr.bf16.gmra.mxu0 %v1058
      %v1412 = vpop.f32.mrf.mxu0
      %v1413 = vadd.f32 %v1325, %v1412
      %v1414 = vpop.f32.mrf.mxu0
      %v1415 = vpop.f32.mrf.mxu0
      %v1416 = vpop.f32.mrf.mxu0
      %1417 = vdwg.mxu0
      %v1418 = vld [vmem:[%s10] sm:$0x1]
      %v1420 = vlaneseq
      %v1421 = vshrl.u32 %v1420, 7
      %v1422 = vsub.s32 0, %v1421
      %v1423 = vrot.slane %v1418, %v1422
      %v1425 = vadd.f32 %v1413, %v1423
      %v1426 = vsel %vm1052, %v1425, -inf
      %1427 = vmax.xlane.f32.xlu0 %v1426
      %v1428 = vpop.xlane.xlu0 %1427
      %1429 = vst.msk [vmem:[%s475] sm:$0xff] %vm1056, %v1428
      %p1430 = scmp.lt.s32.totalorder %s28, 1
      %s1431 = scalar_select %p1430, %s28, 1
      %p1432 = scmp.lt.s32.totalorder %s29, 0
      %s1433 = scalar_select %p1432, %s29, 0
      %s1434 = sadd.s32 %s1433, %s1431
      %s1435 = smul.addr %s1434, 8
      %s1436 = scalar_lea.vmem %s11, %s1435
      %p1437 = scmp.lt.s32.totalorder %s28, 1
      %s1438 = scalar_select %p1437, %s28, 1
      %p1439 = scmp.lt.s32.totalorder %s29, 0
      %s1440 = scalar_select %p1439, %s29, 0
      %s1441 = sadd.s32 %s1440, %s1438
      %s1442 = smul.addr %s1441, 8
      %s1443 = scalar_lea.vmem %s12, %s1442
      // Predicated region
      $region65: #{highway_maxout_forward.4} parent=63 // pred_check
        %p1444 = pneg %p299
      $region66: #{highway_maxout_forward.4} parent=63 // pred_check_branch
        %1446 = sbr.rel (%p1444) target = $region68
      $region67: #{highway_maxout_forward.4} parent=63 // pred_region
        _
      $region68: #{highway_maxout_forward.4} parent=63 // pred_fallthru
        _
      // Predicated region
      $region69: #{highway_maxout_forward.4} parent=63 // pred_check
        %p1447 = pneg %p327
      $region70: #{highway_maxout_forward.4} parent=63 // pred_check_branch
        %1449 = sbr.rel (%p1447) target = $region72
      $region71: #{highway_maxout_forward.4} parent=63 // pred_region
        _
      $region72: #{highway_maxout_forward.4} parent=63 // pred_fallthru
        _
    $region64: #{highway_maxout_forward.4} parent=5 // pred_fallthru
      _
    %p1450 = scmp.le.s32.totalorder 2, %s19
    // Predicated region
    $region73: #{highway_maxout_forward.4} parent=5 // pred_check
      %p1451 = pneg %p1450
    $region74: #{highway_maxout_forward.4} parent=5 // pred_check_branch
      %1453 = sbr.rel (%p1451) target = $region76
    $region75: #{highway_maxout_forward.4} parent=5 // pred_region
      %s1454 = ssub.s32 %s19, 2
      // Predicated region
      $region77: #{highway_maxout_forward.4} parent=75 // pred_check
        %p1455 = pneg %p305
      $region78: #{highway_maxout_forward.4} parent=75 // pred_check_branch
        %1457 = sbr.rel (%p1455) target = $region80
      $region79: #{highway_maxout_forward.4} parent=75 // pred_region
        %p1458 = scmp.lt.s32.totalorder %s30, 1
        %s1459 = scalar_select %p1458, %s30, 1
        %p1460 = scmp.lt.s32.totalorder %s31, 0
        %s1461 = scalar_select %p1460, %s31, 0
        %s1462 = sadd.s32 %s1461, %s1459
        %s1463 = smul.addr %s1462, 8
        %s1464 = scalar_lea.vmem %s11, %s1463
      $region80: #{highway_maxout_forward.4} parent=75 // pred_fallthru
        _
      // Predicated region
      $region81: #{highway_maxout_forward.4} parent=75 // pred_check
        %p1465 = pneg %p333
      $region82: #{highway_maxout_forward.4} parent=75 // pred_check_branch
        %1467 = sbr.rel (%p1465) target = $region84
      $region83: #{highway_maxout_forward.4} parent=75 // pred_region
        %p1468 = scmp.lt.s32.totalorder %s30, 1
        %s1469 = scalar_select %p1468, %s30, 1
        %p1470 = scmp.lt.s32.totalorder %s31, 0
        %s1471 = scalar_select %p1470, %s31, 0
        %s1472 = sadd.s32 %s1471, %s1469
        %s1473 = smul.addr %s1472, 8
        %s1474 = scalar_lea.vmem %s12, %s1473
      $region84: #{highway_maxout_forward.4} parent=75 // pred_fallthru
        _
    $region76: #{highway_maxout_forward.4} parent=5 // pred_fallthru
      _
  $region6: #{highway_maxout_forward.4} parent=0 // loop_footer
    %s23 = sadd.s32 1, %s19
  $region7: #{highway_maxout_forward.4} parent=0 // loop_footer_branch
    %18 = sbr.rel target = $region3
  $region8: #{highway_maxout_forward.4} parent=0 // loop_exit
    _

</llo_original>
